<compile_context>
chip_gen: v6e
topology: v6e:2x2x1
jax: 0.10.0
libtpu: 0.0.40
codegen_flags: <defaults>
</compile_context>

<pallas_src>
import functools

import jax
import jax.numpy as jnp
from jax.experimental import pallas as pl
from jax.experimental.pallas import tpu as pltpu

BN_EPS = 1e-3
LANE = 128


def _round_up(x, m):
    return (x + m - 1) // m * m


def _pick_row_tile(h_out, target=8):
    """Largest divisor of h_out that is <= target (keeps the output H-tiling exact)."""
    t = max(1, min(target, h_out))
    while h_out % t:
        t -= 1
    return t


def _conv_stats_kernel(x_ref, w_ref, conv_ref, stats_ref, acc_ref, *, th, w_out):
    """One grid step: conv over a (TH x W_out) output-row tile + BN partial sums.

    x_ref:     (TH+KH-1, Wp, CIN_p)   halo'd, spatially padded, channel-padded input
    w_ref:     (KH, KW, CIN_p, COUT_p) weights (resident: same block every step)
    conv_ref:  (TH, W_out, COUT_p)     f32 conv output tile
    stats_ref: (2, COUT_p)             per-tile [sum, sum_of_squares] over rows
    acc_ref:   VMEM scratch (TH*W_out, COUT_p) f32
    """
    kh_n, kw_n, cin_p, cout_p = w_ref.shape

    # Taps are an inner unrolled loop (no grid reduction axis) -> zero-init per step.
    acc_ref[...] = jnp.zeros_like(acc_ref)
    for kh in range(kh_n):
        for kw in range(kw_n):
            patch = x_ref[kh:kh + th, kw:kw + w_out, :]        # (TH, W_out, CIN_p), tile-sized slice
            lhs = patch.reshape(th * w_out, cin_p)             # rows -> sublanes, CIN_p -> lanes
            acc_ref[...] += jnp.dot(lhs, w_ref[kh, kw],
                                    preferred_element_type=jnp.float32)

    acc = acc_ref[...]                                         # (TH*W_out, COUT_p) f32
    conv_ref[...] = acc.reshape(th, w_out, cout_p)
    # BatchNorm partial sums for the cross-tile (training-mode) batch statistics.
    stats_ref[0:1, :] = jnp.sum(acc, axis=0, keepdims=True)
    stats_ref[1:2, :] = jnp.sum(acc * acc, axis=0, keepdims=True)


def _bn_relu_kernel(conv_ref, scale_ref, shift_ref, out_ref):
    """One grid step: y = conv * scale + shift; ReLU; lane-dense store."""
    y = conv_ref[...] * scale_ref[...] + shift_ref[...]        # (TH, W_out, COUT_p)
    out_ref[...] = jnp.maximum(y, 0.0).astype(out_ref.dtype)


def conv_block_nhwc(x_nhwc, weight_oihw, gamma, beta, *, padding=1, row_tile=8):
    """Fused Conv2d(bias=False, stride=1) + BatchNorm2d(train) + ReLU, NHWC in/out."""
    N, H, W, CIN = x_nhwc.shape
    COUT, cin_w, KH, KW = weight_oihw.shape
    assert cin_w == CIN, (cin_w, CIN)

    H_out = H + 2 * padding - KH + 1
    W_out = W + 2 * padding - KW + 1
    Wp = W + 2 * padding
    CIN_p = _round_up(CIN, LANE)        # full-width MXU contraction
    COUT_p = _round_up(COUT, LANE)      # lane-dense output stores
    TH = _pick_row_tile(H_out, row_tile)
    n_h = H_out // TH
    THK = TH + KH - 1                   # halo'd row-window height

    # ---- HBM-side glue: channel pad + spatial pad + overlapping H windows ----
    # (the (KH-1)/TH halo duplication lets plain Blocked BlockSpecs tile H exactly)
    x_p = jnp.pad(x_nhwc, ((0, 0), (padding, padding), (padding, padding),
                           (0, CIN_p - CIN)))
    x_win = jnp.stack([x_p[:, i * TH: i * TH + THK] for i in range(n_h)], axis=1)
    # x_win: (N, n_h, THK, Wp, CIN_p)

    w_hwio = jnp.transpose(weight_oihw, (2, 3, 1, 0))           # (KH, KW, CIN, COUT)
    w_p = jnp.pad(w_hwio, ((0, 0), (0, 0), (0, CIN_p - CIN),
                           (0, COUT_p - COUT))).astype(jnp.float32)

    compiler_params = pltpu.CompilerParams(
        dimension_semantics=("parallel", "parallel"),
        vmem_limit_bytes=32 * 1024 * 1024,
    )

    # ---- pass 1: tiled conv + per-tile BN partial sums -----------------------
    conv_out, stats = pl.pallas_call(
        functools.partial(_conv_stats_kernel, th=TH, w_out=W_out),
        grid=(N, n_h),
        in_specs=[
            pl.BlockSpec((None, None, THK, Wp, CIN_p), lambda n, i: (n, i, 0, 0, 0)),
            pl.BlockSpec((KH, KW, CIN_p, COUT_p), lambda n, i: (0, 0, 0, 0)),
        ],
        out_specs=[
            pl.BlockSpec((None, TH, W_out, COUT_p), lambda n, i: (n, i, 0, 0)),
            pl.BlockSpec((None, None, 2, COUT_p), lambda n, i: (n, i, 0, 0)),
        ],
        out_shape=[
            jax.ShapeDtypeStruct((N, H_out, W_out, COUT_p), jnp.float32),
            jax.ShapeDtypeStruct((N, n_h, 2, COUT_p), jnp.float32),
        ],
        scratch_shapes=[pltpu.VMEM((TH * W_out, COUT_p), jnp.float32)],
        compiler_params=compiler_params,
    )(x_win, w_p)

    # ---- glue: global (training-mode) batch stats, hoisted scale/shift -------
    count = jnp.float32(N * H_out * W_out)
    total = jnp.sum(stats, axis=(0, 1))                         # (2, COUT_p)
    mean = total[0] / count
    # E[x^2] - E[x]^2 in f32; activations are O(1) here so cancellation is benign.
    var = total[1] / count - mean * mean
    inv_std = jax.lax.rsqrt(var + BN_EPS)
    g_p = jnp.pad(gamma.astype(jnp.float32), (0, COUT_p - COUT))
    b_p = jnp.pad(beta.astype(jnp.float32), (0, COUT_p - COUT))
    scale = (g_p * inv_std).reshape(1, 1, COUT_p)
    shift = (b_p - mean * g_p * inv_std).reshape(1, 1, COUT_p)

    # ---- pass 2: normalize + ReLU (lane-dense output) ------------------------
    out_nhwc_p = pl.pallas_call(
        _bn_relu_kernel,
        grid=(N, n_h),
        in_specs=[
            pl.BlockSpec((None, TH, W_out, COUT_p), lambda n, i: (n, i, 0, 0)),
            pl.BlockSpec((1, 1, COUT_p), lambda n, i: (0, 0, 0)),
            pl.BlockSpec((1, 1, COUT_p), lambda n, i: (0, 0, 0)),
        ],
        out_specs=pl.BlockSpec((None, TH, W_out, COUT_p), lambda n, i: (n, i, 0, 0)),
        out_shape=jax.ShapeDtypeStruct((N, H_out, W_out, COUT_p), x_nhwc.dtype),
        compiler_params=compiler_params,
    )(conv_out, scale, shift)

    return out_nhwc_p[..., :COUT]                               # strip channel padding


def conv_block(x_nchw, weight_oihw, gamma, beta, *, padding=1):
    """PyTorch-layout entry point (NCHW in / NCHW out)."""
    x_nhwc = jnp.transpose(x_nchw, (0, 2, 3, 1))
    out_nhwc = conv_block_nhwc(x_nhwc, weight_oihw, gamma, beta, padding=padding)
    return jnp.transpose(out_nhwc, (0, 3, 1, 2))


def _reference(x_nchw, weight_oihw, gamma, beta, *, padding=1):
    """Plain-JAX reference matching PyTorch ConvBlock forward (train-mode BN)."""
    conv = jax.lax.conv_general_dilated(
        x_nchw.astype(jnp.float32),
        weight_oihw.astype(jnp.float32),
        window_strides=(1, 1),
        padding=[(padding, padding), (padding, padding)],
        dimension_numbers=("NCHW", "OIHW", "NCHW"),
    )
    mean = jnp.mean(conv, axis=(0, 2, 3), keepdims=True)
    var = jnp.mean((conv - mean) ** 2, axis=(0, 2, 3), keepdims=True)
    g = gamma.reshape(1, -1, 1, 1)
    b = beta.reshape(1, -1, 1, 1)
    y = (conv - mean) * jax.lax.rsqrt(var + BN_EPS) * g + b
    return jnp.maximum(y, 0.0).astype(x_nchw.dtype)


if __name__ == "__main__":
    # Small deterministic example: N=2, Cin=4, H=W=16, Cout=8, k=3, pad=1.
    key = jax.random.PRNGKey(0)
    kx, kw = jax.random.split(key)

    N, CIN, H, W = 2, 4, 16, 16
    COUT, KH, KW = 8, 3, 3

    x = jax.random.normal(kx, (N, CIN, H, W), dtype=jnp.float32)
    fan_in = CIN * KH * KW
    weight = jax.random.uniform(
        kw, (COUT, CIN, KH, KW), dtype=jnp.float32,
        minval=-(fan_in ** -0.5), maxval=fan_in ** -0.5)
    gamma = jnp.ones((COUT,), dtype=jnp.float32)
    beta = jnp.zeros((COUT,), dtype=jnp.float32)

    out = conv_block(x, weight, gamma, beta, padding=1)
    out = jax.block_until_ready(out)

    ref = _reference(x, weight, gamma, beta, padding=1)
    assert out.shape == (N, COUT, H, W), out.shape
    max_err = float(jnp.max(jnp.abs(out - ref)))
    assert jnp.allclose(out, ref, atol=2e-4, rtol=2e-4), max_err

    print("KERNEL_OK")
</pallas_src>

<mosaic_0001>
module attributes {stable_mosaic.version = 11 : i64} {
  func.func @_conv_stats_kernel(%arg0: i32, %arg1: i32, %arg2: memref<1x1x10x18x128xf32, #tpu.memory_space<vmem>>, %arg3: memref<3x3x128x128xf32, #tpu.memory_space<vmem>>, %arg4: memref<1x8x16x128xf32, #tpu.memory_space<vmem>>, %arg5: memref<1x1x2x128xf32, #tpu.memory_space<vmem>>, %arg6: memref<128x128xf32, #tpu.memory_space<vmem>>) attributes {dimension_semantics = [#tpu.dimension_semantics<parallel>, #tpu.dimension_semantics<parallel>], iteration_bounds = array<i64: 2, 2>, scalar_prefetch = 0 : i64, scratch_operands = 1 : i64, tpu.core_type = #tpu.core_type<tc>, window_params = [{transform_indices = @transform_0, window_bounds = array<i64: 1, 1, 10, 18, 128>}, {pipeline_mode = #tpu.pipeline_mode<synchronous>, transform_indices = @transform_1, window_bounds = array<i64: 3, 3, 128, 128>}, {transform_indices = @transform_2, window_bounds = array<i64: 1, 8, 16, 128>}, {transform_indices = @transform_3, window_bounds = array<i64: 1, 1, 2, 128>}]} {
    %cst = arith.constant 0.000000e+00 : f32
    %0 = vector.broadcast %cst : f32 to vector<128x128xf32>
    %c0 = arith.constant 0 : index
    %c0_0 = arith.constant 0 : index
    %1 = vector.load %arg6[%c0, %c0_0] : memref<128x128xf32, #tpu.memory_space<vmem>>, vector<128x128xf32>
    tpu.vector_store %arg6[%c0, %c0_0], %0 {strides = array<i32>} : memref<128x128xf32, #tpu.memory_space<vmem>>, vector<128x128xf32>,
    %c0_1 = arith.constant 0 : index
    %c0_2 = arith.constant 0 : index
    %c0_3 = arith.constant 0 : index
    %c0_4 = arith.constant 0 : index
    %c0_5 = arith.constant 0 : index
    %2 = vector.load %arg2[%c0_1, %c0_2, %c0_3, %c0_4, %c0_5] : memref<1x1x10x18x128xf32, #tpu.memory_space<vmem>>, vector<1x1x8x16x128xf32>
    %3 = vector.shape_cast %2 : vector<1x1x8x16x128xf32> to vector<8x16x128xf32>
    %4 = vector.shape_cast %3 : vector<8x16x128xf32> to vector<128x128xf32>
    %c0_6 = arith.constant 0 : index
    %c0_7 = arith.constant 0 : index
    %5 = vector.load %arg6[%c0_6, %c0_7] : memref<128x128xf32, #tpu.memory_space<vmem>>, vector<128x128xf32>
    %c0_8 = arith.constant 0 : index
    %c0_9 = arith.constant 0 : index
    %c0_10 = arith.constant 0 : index
    %c0_11 = arith.constant 0 : index
    %6 = vector.load %arg3[%c0_8, %c0_9, %c0_10, %c0_11] : memref<3x3x128x128xf32, #tpu.memory_space<vmem>>, vector<1x1x128x128xf32>
    %7 = vector.shape_cast %6 : vector<1x1x128x128xf32> to vector<128x128xf32>
    %cst_12 = arith.constant dense<0.000000e+00> : vector<128x128xf32>
    %8 = tpu.matmul %4, %7, %cst_12 {dimension_numbers = #tpu.dot_dimension_numbers<[1], [0], [0], [1], [0, 0, 1, 1], [], []>} : vector<128x128xf32>, vector<128x128xf32>, vector<128x128xf32> -> vector<128x128xf32>
    %9 = arith.addf %5, %8 : vector<128x128xf32>
    %c0_13 = arith.constant 0 : index
    %c0_14 = arith.constant 0 : index
    %10 = vector.load %arg6[%c0_13, %c0_14] : memref<128x128xf32, #tpu.memory_space<vmem>>, vector<128x128xf32>
    tpu.vector_store %arg6[%c0_13, %c0_14], %9 {strides = array<i32>} : memref<128x128xf32, #tpu.memory_space<vmem>>, vector<128x128xf32>,
    %c0_15 = arith.constant 0 : index
    %c0_16 = arith.constant 0 : index
    %c0_17 = arith.constant 0 : index
    %c1 = arith.constant 1 : index
    %c0_18 = arith.constant 0 : index
    %11 = vector.load %arg2[%c0_15, %c0_16, %c0_17, %c1, %c0_18] : memref<1x1x10x18x128xf32, #tpu.memory_space<vmem>>, vector<1x1x8x16x128xf32>
    %12 = vector.shape_cast %11 : vector<1x1x8x16x128xf32> to vector<8x16x128xf32>
    %13 = vector.shape_cast %12 : vector<8x16x128xf32> to vector<128x128xf32>
    %c0_19 = arith.constant 0 : index
    %c0_20 = arith.constant 0 : index
    %14 = vector.load %arg6[%c0_19, %c0_20] : memref<128x128xf32, #tpu.memory_space<vmem>>, vector<128x128xf32>
    %c0_21 = arith.constant 0 : index
    %c1_22 = arith.constant 1 : index
    %c0_23 = arith.constant 0 : index
    %c0_24 = arith.constant 0 : index
    %15 = vector.load %arg3[%c0_21, %c1_22, %c0_23, %c0_24] : memref<3x3x128x128xf32, #tpu.memory_space<vmem>>, vector<1x1x128x128xf32>
    %16 = vector.shape_cast %15 : vector<1x1x128x128xf32> to vector<128x128xf32>
    %cst_25 = arith.constant dense<0.000000e+00> : vector<128x128xf32>
    %17 = tpu.matmul %13, %16, %cst_25 {dimension_numbers = #tpu.dot_dimension_numbers<[1], [0], [0], [1], [0, 0, 1, 1], [], []>} : vector<128x128xf32>, vector<128x128xf32>, vector<128x128xf32> -> vector<128x128xf32>
    %18 = arith.addf %14, %17 : vector<128x128xf32>
    %c0_26 = arith.constant 0 : index
    %c0_27 = arith.constant 0 : index
    %19 = vector.load %arg6[%c0_26, %c0_27] : memref<128x128xf32, #tpu.memory_space<vmem>>, vector<128x128xf32>
    tpu.vector_store %arg6[%c0_26, %c0_27], %18 {strides = array<i32>} : memref<128x128xf32, #tpu.memory_space<vmem>>, vector<128x128xf32>,
    %c0_28 = arith.constant 0 : index
    %c0_29 = arith.constant 0 : index
    %c0_30 = arith.constant 0 : index
    %c2 = arith.constant 2 : index
    %c0_31 = arith.constant 0 : index
    %20 = vector.load %arg2[%c0_28, %c0_29, %c0_30, %c2, %c0_31] : memref<1x1x10x18x128xf32, #tpu.memory_space<vmem>>, vector<1x1x8x16x128xf32>
    %21 = vector.shape_cast %20 : vector<1x1x8x16x128xf32> to vector<8x16x128xf32>
    %22 = vector.shape_cast %21 : vector<8x16x128xf32> to vector<128x128xf32>
    %c0_32 = arith.constant 0 : index
    %c0_33 = arith.constant 0 : index
    %23 = vector.load %arg6[%c0_32, %c0_33] : memref<128x128xf32, #tpu.memory_space<vmem>>, vector<128x128xf32>
    %c0_34 = arith.constant 0 : index
    %c2_35 = arith.constant 2 : index
    %c0_36 = arith.constant 0 : index
    %c0_37 = arith.constant 0 : index
    %24 = vector.load %arg3[%c0_34, %c2_35, %c0_36, %c0_37] : memref<3x3x128x128xf32, #tpu.memory_space<vmem>>, vector<1x1x128x128xf32>
    %25 = vector.shape_cast %24 : vector<1x1x128x128xf32> to vector<128x128xf32>
    %cst_38 = arith.constant dense<0.000000e+00> : vector<128x128xf32>
    %26 = tpu.matmul %22, %25, %cst_38 {dimension_numbers = #tpu.dot_dimension_numbers<[1], [0], [0], [1], [0, 0, 1, 1], [], []>} : vector<128x128xf32>, vector<128x128xf32>, vector<128x128xf32> -> vector<128x128xf32>
    %27 = arith.addf %23, %26 : vector<128x128xf32>
    %c0_39 = arith.constant 0 : index
    %c0_40 = arith.constant 0 : index
    %28 = vector.load %arg6[%c0_39, %c0_40] : memref<128x128xf32, #tpu.memory_space<vmem>>, vector<128x128xf32>
    tpu.vector_store %arg6[%c0_39, %c0_40], %27 {strides = array<i32>} : memref<128x128xf32, #tpu.memory_space<vmem>>, vector<128x128xf32>,
    %c0_41 = arith.constant 0 : index
    %c0_42 = arith.constant 0 : index
    %c1_43 = arith.constant 1 : index
    %c0_44 = arith.constant 0 : index
    %c0_45 = arith.constant 0 : index
    %29 = vector.load %arg2[%c0_41, %c0_42, %c1_43, %c0_44, %c0_45] : memref<1x1x10x18x128xf32, #tpu.memory_space<vmem>>, vector<1x1x8x16x128xf32>
    %30 = vector.shape_cast %29 : vector<1x1x8x16x128xf32> to vector<8x16x128xf32>
    %31 = vector.shape_cast %30 : vector<8x16x128xf32> to vector<128x128xf32>
    %c0_46 = arith.constant 0 : index
    %c0_47 = arith.constant 0 : index
    %32 = vector.load %arg6[%c0_46, %c0_47] : memref<128x128xf32, #tpu.memory_space<vmem>>, vector<128x128xf32>
    %c1_48 = arith.constant 1 : index
    %c0_49 = arith.constant 0 : index
    %c0_50 = arith.constant 0 : index
    %c0_51 = arith.constant 0 : index
    %33 = vector.load %arg3[%c1_48, %c0_49, %c0_50, %c0_51] : memref<3x3x128x128xf32, #tpu.memory_space<vmem>>, vector<1x1x128x128xf32>
    %34 = vector.shape_cast %33 : vector<1x1x128x128xf32> to vector<128x128xf32>
    %cst_52 = arith.constant dense<0.000000e+00> : vector<128x128xf32>
    %35 = tpu.matmul %31, %34, %cst_52 {dimension_numbers = #tpu.dot_dimension_numbers<[1], [0], [0], [1], [0, 0, 1, 1], [], []>} : vector<128x128xf32>, vector<128x128xf32>, vector<128x128xf32> -> vector<128x128xf32>
    %36 = arith.addf %32, %35 : vector<128x128xf32>
    %c0_53 = arith.constant 0 : index
    %c0_54 = arith.constant 0 : index
    %37 = vector.load %arg6[%c0_53, %c0_54] : memref<128x128xf32, #tpu.memory_space<vmem>>, vector<128x128xf32>
    tpu.vector_store %arg6[%c0_53, %c0_54], %36 {strides = array<i32>} : memref<128x128xf32, #tpu.memory_space<vmem>>, vector<128x128xf32>,
    %c0_55 = arith.constant 0 : index
    %c0_56 = arith.constant 0 : index
    %c1_57 = arith.constant 1 : index
    %c1_58 = arith.constant 1 : index
    %c0_59 = arith.constant 0 : index
    %38 = vector.load %arg2[%c0_55, %c0_56, %c1_57, %c1_58, %c0_59] : memref<1x1x10x18x128xf32, #tpu.memory_space<vmem>>, vector<1x1x8x16x128xf32>
    %39 = vector.shape_cast %38 : vector<1x1x8x16x128xf32> to vector<8x16x128xf32>
    %40 = vector.shape_cast %39 : vector<8x16x128xf32> to vector<128x128xf32>
    %c0_60 = arith.constant 0 : index
    %c0_61 = arith.constant 0 : index
    %41 = vector.load %arg6[%c0_60, %c0_61] : memref<128x128xf32, #tpu.memory_space<vmem>>, vector<128x128xf32>
    %c1_62 = arith.constant 1 : index
    %c1_63 = arith.constant 1 : index
    %c0_64 = arith.constant 0 : index
    %c0_65 = arith.constant 0 : index
    %42 = vector.load %arg3[%c1_62, %c1_63, %c0_64, %c0_65] : memref<3x3x128x128xf32, #tpu.memory_space<vmem>>, vector<1x1x128x128xf32>
    %43 = vector.shape_cast %42 : vector<1x1x128x128xf32> to vector<128x128xf32>
    %cst_66 = arith.constant dense<0.000000e+00> : vector<128x128xf32>
    %44 = tpu.matmul %40, %43, %cst_66 {dimension_numbers = #tpu.dot_dimension_numbers<[1], [0], [0], [1], [0, 0, 1, 1], [], []>} : vector<128x128xf32>, vector<128x128xf32>, vector<128x128xf32> -> vector<128x128xf32>
    %45 = arith.addf %41, %44 : vector<128x128xf32>
    %c0_67 = arith.constant 0 : index
    %c0_68 = arith.constant 0 : index
    %46 = vector.load %arg6[%c0_67, %c0_68] : memref<128x128xf32, #tpu.memory_space<vmem>>, vector<128x128xf32>
    tpu.vector_store %arg6[%c0_67, %c0_68], %45 {strides = array<i32>} : memref<128x128xf32, #tpu.memory_space<vmem>>, vector<128x128xf32>,
    %c0_69 = arith.constant 0 : index
    %c0_70 = arith.constant 0 : index
    %c1_71 = arith.constant 1 : index
    %c2_72 = arith.constant 2 : index
    %c0_73 = arith.constant 0 : index
    %47 = vector.load %arg2[%c0_69, %c0_70, %c1_71, %c2_72, %c0_73] : memref<1x1x10x18x128xf32, #tpu.memory_space<vmem>>, vector<1x1x8x16x128xf32>
    %48 = vector.shape_cast %47 : vector<1x1x8x16x128xf32> to vector<8x16x128xf32>
    %49 = vector.shape_cast %48 : vector<8x16x128xf32> to vector<128x128xf32>
    %c0_74 = arith.constant 0 : index
    %c0_75 = arith.constant 0 : index
    %50 = vector.load %arg6[%c0_74, %c0_75] : memref<128x128xf32, #tpu.memory_space<vmem>>, vector<128x128xf32>
    %c1_76 = arith.constant 1 : index
    %c2_77 = arith.constant 2 : index
    %c0_78 = arith.constant 0 : index
    %c0_79 = arith.constant 0 : index
    %51 = vector.load %arg3[%c1_76, %c2_77, %c0_78, %c0_79] : memref<3x3x128x128xf32, #tpu.memory_space<vmem>>, vector<1x1x128x128xf32>
    %52 = vector.shape_cast %51 : vector<1x1x128x128xf32> to vector<128x128xf32>
    %cst_80 = arith.constant dense<0.000000e+00> : vector<128x128xf32>
    %53 = tpu.matmul %49, %52, %cst_80 {dimension_numbers = #tpu.dot_dimension_numbers<[1], [0], [0], [1], [0, 0, 1, 1], [], []>} : vector<128x128xf32>, vector<128x128xf32>, vector<128x128xf32> -> vector<128x128xf32>
    %54 = arith.addf %50, %53 : vector<128x128xf32>
    %c0_81 = arith.constant 0 : index
    %c0_82 = arith.constant 0 : index
    %55 = vector.load %arg6[%c0_81, %c0_82] : memref<128x128xf32, #tpu.memory_space<vmem>>, vector<128x128xf32>
    tpu.vector_store %arg6[%c0_81, %c0_82], %54 {strides = array<i32>} : memref<128x128xf32, #tpu.memory_space<vmem>>, vector<128x128xf32>,
    %c0_83 = arith.constant 0 : index
    %c0_84 = arith.constant 0 : index
    %c2_85 = arith.constant 2 : index
    %c0_86 = arith.constant 0 : index
    %c0_87 = arith.constant 0 : index
    %56 = vector.load %arg2[%c0_83, %c0_84, %c2_85, %c0_86, %c0_87] : memref<1x1x10x18x128xf32, #tpu.memory_space<vmem>>, vector<1x1x8x16x128xf32>
    %57 = vector.shape_cast %56 : vector<1x1x8x16x128xf32> to vector<8x16x128xf32>
    %58 = vector.shape_cast %57 : vector<8x16x128xf32> to vector<128x128xf32>
    %c0_88 = arith.constant 0 : index
    %c0_89 = arith.constant 0 : index
    %59 = vector.load %arg6[%c0_88, %c0_89] : memref<128x128xf32, #tpu.memory_space<vmem>>, vector<128x128xf32>
    %c2_90 = arith.constant 2 : index
    %c0_91 = arith.constant 0 : index
    %c0_92 = arith.constant 0 : index
    %c0_93 = arith.constant 0 : index
    %60 = vector.load %arg3[%c2_90, %c0_91, %c0_92, %c0_93] : memref<3x3x128x128xf32, #tpu.memory_space<vmem>>, vector<1x1x128x128xf32>
    %61 = vector.shape_cast %60 : vector<1x1x128x128xf32> to vector<128x128xf32>
    %cst_94 = arith.constant dense<0.000000e+00> : vector<128x128xf32>
    %62 = tpu.matmul %58, %61, %cst_94 {dimension_numbers = #tpu.dot_dimension_numbers<[1], [0], [0], [1], [0, 0, 1, 1], [], []>} : vector<128x128xf32>, vector<128x128xf32>, vector<128x128xf32> -> vector<128x128xf32>
    %63 = arith.addf %59, %62 : vector<128x128xf32>
    %c0_95 = arith.constant 0 : index
    %c0_96 = arith.constant 0 : index
    %64 = vector.load %arg6[%c0_95, %c0_96] : memref<128x128xf32, #tpu.memory_space<vmem>>, vector<128x128xf32>
    tpu.vector_store %arg6[%c0_95, %c0_96], %63 {strides = array<i32>} : memref<128x128xf32, #tpu.memory_space<vmem>>, vector<128x128xf32>,
    %c0_97 = arith.constant 0 : index
    %c0_98 = arith.constant 0 : index
    %c2_99 = arith.constant 2 : index
    %c1_100 = arith.constant 1 : index
    %c0_101 = arith.constant 0 : index
    %65 = vector.load %arg2[%c0_97, %c0_98, %c2_99, %c1_100, %c0_101] : memref<1x1x10x18x128xf32, #tpu.memory_space<vmem>>, vector<1x1x8x16x128xf32>
    %66 = vector.shape_cast %65 : vector<1x1x8x16x128xf32> to vector<8x16x128xf32>
    %67 = vector.shape_cast %66 : vector<8x16x128xf32> to vector<128x128xf32>
    %c0_102 = arith.constant 0 : index
    %c0_103 = arith.constant 0 : index
    %68 = vector.load %arg6[%c0_102, %c0_103] : memref<128x128xf32, #tpu.memory_space<vmem>>, vector<128x128xf32>
    %c2_104 = arith.constant 2 : index
    %c1_105 = arith.constant 1 : index
    %c0_106 = arith.constant 0 : index
    %c0_107 = arith.constant 0 : index
    %69 = vector.load %arg3[%c2_104, %c1_105, %c0_106, %c0_107] : memref<3x3x128x128xf32, #tpu.memory_space<vmem>>, vector<1x1x128x128xf32>
    %70 = vector.shape_cast %69 : vector<1x1x128x128xf32> to vector<128x128xf32>
    %cst_108 = arith.constant dense<0.000000e+00> : vector<128x128xf32>
    %71 = tpu.matmul %67, %70, %cst_108 {dimension_numbers = #tpu.dot_dimension_numbers<[1], [0], [0], [1], [0, 0, 1, 1], [], []>} : vector<128x128xf32>, vector<128x128xf32>, vector<128x128xf32> -> vector<128x128xf32>
    %72 = arith.addf %68, %71 : vector<128x128xf32>
    %c0_109 = arith.constant 0 : index
    %c0_110 = arith.constant 0 : index
    %73 = vector.load %arg6[%c0_109, %c0_110] : memref<128x128xf32, #tpu.memory_space<vmem>>, vector<128x128xf32>
    tpu.vector_store %arg6[%c0_109, %c0_110], %72 {strides = array<i32>} : memref<128x128xf32, #tpu.memory_space<vmem>>, vector<128x128xf32>,
    %c0_111 = arith.constant 0 : index
    %c0_112 = arith.constant 0 : index
    %c2_113 = arith.constant 2 : index
    %c2_114 = arith.constant 2 : index
    %c0_115 = arith.constant 0 : index
    %74 = vector.load %arg2[%c0_111, %c0_112, %c2_113, %c2_114, %c0_115] : memref<1x1x10x18x128xf32, #tpu.memory_space<vmem>>, vector<1x1x8x16x128xf32>
    %75 = vector.shape_cast %74 : vector<1x1x8x16x128xf32> to vector<8x16x128xf32>
    %76 = vector.shape_cast %75 : vector<8x16x128xf32> to vector<128x128xf32>
    %c0_116 = arith.constant 0 : index
    %c0_117 = arith.constant 0 : index
    %77 = vector.load %arg6[%c0_116, %c0_117] : memref<128x128xf32, #tpu.memory_space<vmem>>, vector<128x128xf32>
    %c2_118 = arith.constant 2 : index
    %c2_119 = arith.constant 2 : index
    %c0_120 = arith.constant 0 : index
    %c0_121 = arith.constant 0 : index
    %78 = vector.load %arg3[%c2_118, %c2_119, %c0_120, %c0_121] : memref<3x3x128x128xf32, #tpu.memory_space<vmem>>, vector<1x1x128x128xf32>
    %79 = vector.shape_cast %78 : vector<1x1x128x128xf32> to vector<128x128xf32>
    %cst_122 = arith.constant dense<0.000000e+00> : vector<128x128xf32>
    %80 = tpu.matmul %76, %79, %cst_122 {dimension_numbers = #tpu.dot_dimension_numbers<[1], [0], [0], [1], [0, 0, 1, 1], [], []>} : vector<128x128xf32>, vector<128x128xf32>, vector<128x128xf32> -> vector<128x128xf32>
    %81 = arith.addf %77, %80 : vector<128x128xf32>
    %c0_123 = arith.constant 0 : index
    %c0_124 = arith.constant 0 : index
    %82 = vector.load %arg6[%c0_123, %c0_124] : memref<128x128xf32, #tpu.memory_space<vmem>>, vector<128x128xf32>
    tpu.vector_store %arg6[%c0_123, %c0_124], %81 {strides = array<i32>} : memref<128x128xf32, #tpu.memory_space<vmem>>, vector<128x128xf32>,
    %c0_125 = arith.constant 0 : index
    %c0_126 = arith.constant 0 : index
    %83 = vector.load %arg6[%c0_125, %c0_126] : memref<128x128xf32, #tpu.memory_space<vmem>>, vector<128x128xf32>
    %84 = vector.shape_cast %83 : vector<128x128xf32> to vector<8x16x128xf32>
    %c0_127 = arith.constant 0 : index
    %c0_128 = arith.constant 0 : index
    %c0_129 = arith.constant 0 : index
    %c0_130 = arith.constant 0 : index
    %85 = vector.load %arg4[%c0_127, %c0_128, %c0_129, %c0_130] : memref<1x8x16x128xf32, #tpu.memory_space<vmem>>, vector<1x8x16x128xf32>
    %86 = vector.shape_cast %85 : vector<1x8x16x128xf32> to vector<8x16x128xf32>
    %87 = vector.shape_cast %84 : vector<8x16x128xf32> to vector<1x8x16x128xf32>
    tpu.vector_store %arg4[%c0_127, %c0_128, %c0_129, %c0_130], %87 {strides = array<i32>} : memref<1x8x16x128xf32, #tpu.memory_space<vmem>>, vector<1x8x16x128xf32>,
    %cst_131 = arith.constant dense<0.000000e+00> : vector<128xf32>
    %88 = vector.multi_reduction <add>, %83, %cst_131 [0] : vector<128x128xf32> to vector<128xf32>
    %89 = vector.shape_cast %88 : vector<128xf32> to vector<1x128xf32>
    %c0_132 = arith.constant 0 : index
    %c0_133 = arith.constant 0 : index
    %c0_134 = arith.constant 0 : index
    %c0_135 = arith.constant 0 : index
    %90 = vector.load %arg5[%c0_132, %c0_133, %c0_134, %c0_135] : memref<1x1x2x128xf32, #tpu.memory_space<vmem>>, vector<1x1x1x128xf32>
    %91 = vector.shape_cast %90 : vector<1x1x1x128xf32> to vector<1x128xf32>
    %92 = vector.shape_cast %89 : vector<1x128xf32> to vector<1x1x1x128xf32>
    tpu.vector_store %arg5[%c0_132, %c0_133, %c0_134, %c0_135], %92 {strides = array<i32>} : memref<1x1x2x128xf32, #tpu.memory_space<vmem>>, vector<1x1x1x128xf32>,
    %93 = arith.mulf %83, %83 : vector<128x128xf32>
    %cst_136 = arith.constant dense<0.000000e+00> : vector<128xf32>
    %94 = vector.multi_reduction <add>, %93, %cst_136 [0] : vector<128x128xf32> to vector<128xf32>
    %95 = vector.shape_cast %94 : vector<128xf32> to vector<1x128xf32>
    %c0_137 = arith.constant 0 : index
    %c0_138 = arith.constant 0 : index
    %c1_139 = arith.constant 1 : index
    %c0_140 = arith.constant 0 : index
    %96 = vector.load %arg5[%c0_137, %c0_138, %c1_139, %c0_140] : memref<1x1x2x128xf32, #tpu.memory_space<vmem>>, vector<1x1x1x128xf32>
    %97 = vector.shape_cast %96 : vector<1x1x1x128xf32> to vector<1x128xf32>
    %98 = vector.shape_cast %95 : vector<1x128xf32> to vector<1x1x1x128xf32>
    tpu.vector_store %arg5[%c0_137, %c0_138, %c1_139, %c0_140], %98 {strides = array<i32>} : memref<1x1x2x128xf32, #tpu.memory_space<vmem>>, vector<1x1x1x128xf32>,
    return
  }
  func.func @transform_0(%arg0: i32, %arg1: i32) -> (i32, i32, i32, i32, i32) {
    %c0_i32 = arith.constant 0 : i32
    %c0_i32_0 = arith.constant 0 : i32
    %c0_i32_1 = arith.constant 0 : i32
    %c0_i32_2 = arith.constant 0 : i32
    return %arg0, %arg1, %c0_i32, %c0_i32_0, %c0_i32_1 : i32, i32, i32, i32, i32
  }
  func.func @transform_1(%arg0: i32, %arg1: i32) -> (i32, i32, i32, i32) {
    %c0_i32 = arith.constant 0 : i32
    %c0_i32_0 = arith.constant 0 : i32
    %c0_i32_1 = arith.constant 0 : i32
    %c0_i32_2 = arith.constant 0 : i32
    %c0_i32_3 = arith.constant 0 : i32
    return %c0_i32, %c0_i32_0, %c0_i32_1, %c0_i32_2 : i32, i32, i32, i32
  }
  func.func @transform_2(%arg0: i32, %arg1: i32) -> (i32, i32, i32, i32) {
    %c0_i32 = arith.constant 0 : i32
    %c0_i32_0 = arith.constant 0 : i32
    %c0_i32_1 = arith.constant 0 : i32
    return %arg0, %arg1, %c0_i32, %c0_i32_0 : i32, i32, i32, i32
  }
  func.func @transform_3(%arg0: i32, %arg1: i32) -> (i32, i32, i32, i32) {
    %c0_i32 = arith.constant 0 : i32
    %c0_i32_0 = arith.constant 0 : i32
    %c0_i32_1 = arith.constant 0 : i32
    return %arg0, %arg1, %c0_i32, %c0_i32_0 : i32, i32, i32, i32
  }
}

</mosaic_0001>

<llo_original>
// kernel: tpu_custom_call.1
$region0: #{tpu_custom_call.1}
  #allocation0 [shape = 'u32[]', space=smem, size = 0x4, offset = 0x4, fixed_abs, tag = 'smem constant byte address 0x4 - core index']
  #allocation1 [shape = 'u32[144,128]{1,0:T(1,128)}', space=vmem, size = 0x12000, scoped, tag = 'internal scratch']
  #allocation2 [shape = 'f32[128,128]{1,0:T(8,128)}', space=vmem, size = 0x10000, scoped, tag = 'scratch operand']
  %s0 = inlined_call_operand.vmem [shape: f32[2,2,10,18,128], index: 0, kind: input, shape index: {}]
  %s1 = inlined_call_operand.vmem [shape: f32[3,3,128,128], index: 1, kind: input, shape index: {}]
  %s2 = inlined_call_operand.hbm [shape: f32[2,16,16,128], index: 2, kind: output, shape index: {0}]
  %s3 = inlined_call_operand.hbm [shape: f32[2,2,2,128], index: 3, kind: output, shape index: {1}]
  %4 = xla_tuple %s2, %s3
  %s5 = sld [smem:[#allocation0]]
  $region49: #{tpu_custom_call.1} parent=0
    _
  %s7 = ssub.s32 1, %s5
  %s8 = scalar_select 0, %s7, %s5
  $region1: #{tpu_custom_call.1} parent=0
    #allocation3 [shape = 'u8[131072]{0}', space=vmem, size = 0x20000, scoped, tag = 'output window, operand 0']
    #allocation4 [shape = 's32[2]{0}', space=sflag, size = 0x8, scoped, tag = 'scoped memory for tpu_custom_call.1']
    #allocation5 [shape = 'u8[2048]{0}', space=vmem, size = 0x800, scoped, tag = 'output window, operand 1']
    #allocation6 [shape = 's32[2]{0}', space=sflag, size = 0x8, scoped, tag = 'scoped memory for tpu_custom_call.1']
    %9 = vsyncpa [#allocation4], 0
    %s10 = scalar_lea.sflag [#allocation4], 1
    %11 = vsyncpa %s10, 0
    %12 = vsyncpa [#allocation6], 0
    %s13 = scalar_lea.sflag [#allocation6], 1
    %14 = vsyncpa %s13, 0
    loop: start=0, step=1, limit=6
    $region2: #{tpu_custom_call.1} parent=1 // loop_pre_header
      _
    $region3: #{tpu_custom_call.1} parent=1 // loop_header
      %s16 = sphi 0, %s20
      %p17 = scmp.ge.s32.totalorder %s16, 6
      %s23 = sphi 0, %s35
      %s24 = sphi 0, %s31
      %s25 = sphi 0, %s23
      %s26 = sphi 0, %s24
      %s27 = sphi 0, %s25
      %s28 = sphi 0, %s26
      %s40 = sphi 0, %s42
      %s43 = sphi 0, %s40
      %s44 = sphi 0, %s43
      %s60 = sphi 0, %s44
      %s64 = sphi 0, %s64
      %s66 = sphi 0, %s64
      %s67 = sphi 0, %s66
      %s81 = sphi 0, %s67
      %s89 = sphi 0, %s91
      %s92 = sphi 0, %s89
      %s93 = sphi 0, %s92
      %s109 = sphi 0, %s93
      %s117 = sphi 0, %s119
      %s120 = sphi 0, %s117
      %s121 = sphi 0, %s120
      %s137 = sphi 0, %s121
    $region4: #{tpu_custom_call.1} parent=1 // loop_header_branch
      %19 = sbr.rel (%p17) target = $region8
    $region5: #{tpu_custom_call.1} parent=1 // loop_body
      %s21 = ssub.s32 %s16, 1
      %s22 = ssub.s32 %s16, 2
      %s29 = sadd.s32 1, %s24
      %p30 = scmp.ge.s32.totalorder %s29, 2
      %s31 = scalar_select %p30, 0, %s29
      %s32 = sadd.s32 1, %s23
      %s33 = scalar_select %p30, %s32, %s23
      %p34 = scmp.ge.s32.totalorder %s33, 2
      %s35 = scalar_select %p34, 0, %s33
      %s36 = ssub.s32 %s23, %s35
      %s37 = ssub.s32 %s24, %s31
      %s38 = sor.u32 %s36, %s37
      %p39 = scmp.eq.s32.totalorder %s38, 0
      %s41 = sadd.s32 %s40, 1
      %s42 = scalar_select %p39, %s40, %s41
      %p45 = pneg %p39
      %p46 = scmp.eq.s32.totalorder %s16, 3
      %p47 = por %p45, %p46
      %p48 = scmp.ne.s32.totalorder %s40, %s43
      %p49 = scmp.eq.s32.totalorder %s16, 0
      %p50 = por %p48, %p49
      %p51 = scmp.ne.s32.totalorder %s40, %s43
      %p52 = scmp.eq.s32.totalorder %s21, 3
      %p53 = por %p51, %p52
      %p54 = scmp.ne.s32.totalorder %s43, %s44
      %p55 = scmp.eq.s32.totalorder %s21, 0
      %p56 = por %p54, %p55
      %p57 = scmp.ne.s32.totalorder %s43, %s44
      %p58 = scmp.eq.s32.totalorder %s22, 3
      %p59 = por %p57, %p58
      %p61 = scmp.ne.s32.totalorder %s44, %s60
      %p62 = scmp.eq.s32.totalorder %s22, 0
      %p63 = por %p61, %p62
      %s65 = sadd.s32 %s64, 1
      %p68 = scmp.eq.s32.totalorder %s16, 3
      %p69 = scmp.ne.s32.totalorder %s64, %s66
      %p70 = scmp.eq.s32.totalorder %s16, 0
      %p71 = por %p69, %p70
      %p72 = scmp.ne.s32.totalorder %s64, %s66
      %p73 = scmp.eq.s32.totalorder %s21, 3
      %p74 = por %p72, %p73
      %p75 = scmp.ne.s32.totalorder %s66, %s67
      %p76 = scmp.eq.s32.totalorder %s21, 0
      %p77 = por %p75, %p76
      %p78 = scmp.ne.s32.totalorder %s66, %s67
      %p79 = scmp.eq.s32.totalorder %s22, 3
      %p80 = por %p78, %p79
      %p82 = scmp.ne.s32.totalorder %s67, %s81
      %p83 = scmp.eq.s32.totalorder %s22, 0
      %p84 = por %p82, %p83
      %s85 = ssub.s32 %s23, %s35
      %s86 = ssub.s32 %s24, %s31
      %s87 = sor.u32 %s85, %s86
      %p88 = scmp.eq.s32.totalorder %s87, 0
      %s90 = sadd.s32 %s89, 1
      %s91 = scalar_select %p88, %s89, %s90
      %p94 = pneg %p88
      %p95 = scmp.eq.s32.totalorder %s16, 3
      %p96 = por %p94, %p95
      %p97 = scmp.ne.s32.totalorder %s89, %s92
      %p98 = scmp.eq.s32.totalorder %s16, 0
      %p99 = por %p97, %p98
      %p100 = scmp.ne.s32.totalorder %s89, %s92
      %p101 = scmp.eq.s32.totalorder %s21, 3
      %p102 = por %p100, %p101
      %p103 = scmp.ne.s32.totalorder %s92, %s93
      %p104 = scmp.eq.s32.totalorder %s21, 0
      %p105 = por %p103, %p104
      %p106 = scmp.ne.s32.totalorder %s92, %s93
      %p107 = scmp.eq.s32.totalorder %s22, 3
      %p108 = por %p106, %p107
      %p110 = scmp.ne.s32.totalorder %s93, %s109
      %p111 = scmp.eq.s32.totalorder %s22, 0
      %p112 = por %p110, %p111
      %s113 = ssub.s32 %s23, %s35
      %s114 = ssub.s32 %s24, %s31
      %s115 = sor.u32 %s113, %s114
      %p116 = scmp.eq.s32.totalorder %s115, 0
      %s118 = sadd.s32 %s117, 1
      %s119 = scalar_select %p116, %s117, %s118
      %p122 = pneg %p116
      %p123 = scmp.eq.s32.totalorder %s16, 3
      %p124 = por %p122, %p123
      %p125 = scmp.ne.s32.totalorder %s117, %s120
      %p126 = scmp.eq.s32.totalorder %s16, 0
      %p127 = por %p125, %p126
      %p128 = scmp.ne.s32.totalorder %s117, %s120
      %p129 = scmp.eq.s32.totalorder %s21, 3
      %p130 = por %p128, %p129
      %p131 = scmp.ne.s32.totalorder %s120, %s121
      %p132 = scmp.eq.s32.totalorder %s21, 0
      %p133 = por %p131, %p132
      %p134 = scmp.ne.s32.totalorder %s120, %s121
      %p135 = scmp.eq.s32.totalorder %s22, 3
      %p136 = por %p134, %p135
      %p138 = scmp.ne.s32.totalorder %s121, %s137
      %p139 = scmp.eq.s32.totalorder %s22, 0
      %p140 = por %p138, %p139
      %p141 = scmp.le.s32.totalorder 1, %s16
      %p142 = scmp.lt.s32.totalorder %s16, 5
      %p143 = pnand %p141, %p142
      %p144 = pneg %p143
      // Predicated region
      $region9: #{tpu_custom_call.1} parent=5 // pred_check
        _
      $region10: #{tpu_custom_call.1} parent=5 // pred_check_branch
        %146 = sbr.rel (%p143) target = $region12
      $region11: #{tpu_custom_call.1} parent=5 // pred_region
        %s147 = ssub.s32 %s16, 1
        // Predicated region
        $region13: #{tpu_custom_call.1} parent=11 // pred_check
          %p148 = pneg %p77
        $region14: #{tpu_custom_call.1} parent=11 // pred_check_branch
          %150 = sbr.rel (%p148) target = $region16
        $region15: #{tpu_custom_call.1} parent=11 // pred_region
          _
        $region16: #{tpu_custom_call.1} parent=11 // pred_fallthru
          _
      $region12: #{tpu_custom_call.1} parent=5 // pred_fallthru
        _
      %p151 = scmp.lt.s32.totalorder %s16, 4
      // Predicated region
      $region17: #{tpu_custom_call.1} parent=5 // pred_check
        %p152 = pneg %p151
      $region18: #{tpu_custom_call.1} parent=5 // pred_check_branch
        %154 = sbr.rel (%p152) target = $region20
      $region19: #{tpu_custom_call.1} parent=5 // pred_region
        // Predicated region
        $region21: #{tpu_custom_call.1} parent=19 // pred_check
          %p155 = pneg %p50
        $region22: #{tpu_custom_call.1} parent=19 // pred_check_branch
          %157 = sbr.rel (%p155) target = $region24
        $region23: #{tpu_custom_call.1} parent=19 // pred_region
          %p158 = scmp.lt.s32.totalorder %s23, 1
          %s159 = scalar_select %p158, %s23, 1
          %p160 = scmp.lt.s32.totalorder %s24, 1
          %s161 = scalar_select %p160, %s24, 1
          %s162 = smul.addr %s161, 30
          %s163 = smul.addr %s159, 60
          %s164 = sadd.s32 %s162, %s163
          %s165 = smul.addr %s164, 8
          %s166 = scalar_lea.vmem %s0, %s165
        $region24: #{tpu_custom_call.1} parent=19 // pred_fallthru
          _
      $region20: #{tpu_custom_call.1} parent=5 // pred_fallthru
        _
      %p167 = scmp.le.s32.totalorder 1, %s16
      %p168 = scmp.lt.s32.totalorder %s16, 5
      %p169 = pnand %p167, %p168
      %p170 = pneg %p169
      // Predicated region
      $region25: #{tpu_custom_call.1} parent=5 // pred_check
        _
      $region26: #{tpu_custom_call.1} parent=5 // pred_check_branch
        %172 = sbr.rel (%p169) target = $region28
      $region27: #{tpu_custom_call.1} parent=5 // pred_region
        %s173 = ssub.s32 %s16, 1
        %p174 = scmp.lt.s32.totalorder %s25, 1
        %s175 = scalar_select %p174, %s25, 1
        %p176 = scmp.lt.s32.totalorder %s26, 1
        %s177 = scalar_select %p176, %s26, 1
        %s178 = smul.addr %s177, 30
        %s179 = smul.addr %s175, 60
        %s180 = sadd.s32 %s178, %s179
        %s181 = smul.addr %s180, 8
        %s182 = scalar_lea.vmem %s0, %s181
        %p183 = pneg %p56
        %p184 = pneg %p53
        %p185 = pneg %p77
        %p186 = pneg %p74
        %p187 = pneg %p105
        %p188 = pneg %p102
        %s189 = sand.u32 %s92, 1
        %s190 = scalar_lea.sflag [#allocation4], %s189
        %s191 = sand.u32 %s92, 1
        %s192 = smul.addr %s191, 128
        %s193 = scalar_lea.vmem [#allocation3], %s192
        %p194 = pneg %p133
        %p195 = pneg %p130
        %s196 = sand.u32 %s120, 1
        %s197 = scalar_lea.sflag [#allocation6], %s196
        %s198 = sand.u32 %s120, 1
        %s199 = smul.addr %s198, 2
        %s200 = scalar_lea.vmem [#allocation5], %s199
        %p201 = scmp.lt.s32.totalorder %s25, 1
        %s202 = scalar_select %p201, %s25, 1
        %p203 = scmp.lt.s32.totalorder %s26, 1
        %s204 = scalar_select %p203, %s26, 1
        %s205 = smul.addr %s204, 30
        %s206 = smul.addr %s202, 60
        %s207 = sadd.s32 %s205, %s206
        %s208 = smul.addr %s207, 8
        %s209 = scalar_lea.vmem %s0, %s208
        %s210 = smul.u32 8, %s26
        %211 = vst [vmem:[#allocation2] sm:$0xff] 0.0
        %212 = vst [vmem:[#allocation2 + $0x8] sm:$0xff] 0.0
        %213 = vst [vmem:[#allocation2 + $0x10] sm:$0xff] 0.0
        %214 = vst [vmem:[#allocation2 + $0x18] sm:$0xff] 0.0
        %215 = vst [vmem:[#allocation2 + $0x20] sm:$0xff] 0.0
        %216 = vst [vmem:[#allocation2 + $0x28] sm:$0xff] 0.0
        %217 = vst [vmem:[#allocation2 + $0x30] sm:$0xff] 0.0
        %218 = vst [vmem:[#allocation2 + $0x38] sm:$0xff] 0.0
        %219 = vst [vmem:[#allocation2 + $0x40] sm:$0xff] 0.0
        %220 = vst [vmem:[#allocation2 + $0x48] sm:$0xff] 0.0
        %221 = vst [vmem:[#allocation2 + $0x50] sm:$0xff] 0.0
        %222 = vst [vmem:[#allocation2 + $0x58] sm:$0xff] 0.0
        %223 = vst [vmem:[#allocation2 + $0x60] sm:$0xff] 0.0
        %224 = vst [vmem:[#allocation2 + $0x68] sm:$0xff] 0.0
        %225 = vst [vmem:[#allocation2 + $0x70] sm:$0xff] 0.0
        %226 = vst [vmem:[#allocation2 + $0x78] sm:$0xff] 0.0
        %v227 = vld [vmem:[%s209] sm:$0xff]
        %v228 = vld [vmem:[%s209 + $0x8] sm:$0xff]
        %v229 = vld [vmem:[%s209 + $0x18] sm:$0xff]
        %v230 = vld [vmem:[%s209 + $0x20] sm:$0xff]
        %v231 = vld [vmem:[%s209 + $0x30] sm:$0xff]
        %v232 = vld [vmem:[%s209 + $0x38] sm:$0xff]
        %v233 = vld [vmem:[%s209 + $0x48] sm:$0xff]
        %v234 = vld [vmem:[%s209 + $0x50] sm:$0xff]
        %v235 = vld [vmem:[%s209 + $0x60] sm:$0xff]
        %v236 = vld [vmem:[%s209 + $0x68] sm:$0xff]
        %v237 = vld [vmem:[%s209 + $0x78] sm:$0xff]
        %v238 = vld [vmem:[%s209 + $0x80] sm:$0xff]
        %v239 = vld [vmem:[%s209 + $0x90] sm:$0xff]
        %v240 = vld [vmem:[%s209 + $0x98] sm:$0xff]
        %v241 = vld [vmem:[%s209 + $0xa8] sm:$0xff]
        %v242 = vld [vmem:[%s209 + $0xb0] sm:$0xff]
        %v243 = vld [vmem:[#allocation2] sm:$0xff]
        %v244 = vld [vmem:[#allocation2 + $0x8] sm:$0xff]
        %v245 = vld [vmem:[#allocation2 + $0x10] sm:$0xff]
        %v246 = vld [vmem:[#allocation2 + $0x18] sm:$0xff]
        %v247 = vld [vmem:[#allocation2 + $0x20] sm:$0xff]
        %v248 = vld [vmem:[#allocation2 + $0x28] sm:$0xff]
        %v249 = vld [vmem:[#allocation2 + $0x30] sm:$0xff]
        %v250 = vld [vmem:[#allocation2 + $0x38] sm:$0xff]
        %v251 = vld [vmem:[#allocation2 + $0x40] sm:$0xff]
        %v252 = vld [vmem:[#allocation2 + $0x48] sm:$0xff]
        %v253 = vld [vmem:[#allocation2 + $0x50] sm:$0xff]
        %v254 = vld [vmem:[#allocation2 + $0x58] sm:$0xff]
        %v255 = vld [vmem:[#allocation2 + $0x60] sm:$0xff]
        %v256 = vld [vmem:[#allocation2 + $0x68] sm:$0xff]
        %v257 = vld [vmem:[#allocation2 + $0x70] sm:$0xff]
        %v258 = vld [vmem:[#allocation2 + $0x78] sm:$0xff]
        %v259 = vld [vmem:[%s1] sm:$0xff]
        %v260 = vld [vmem:[%s1 + $0x8] sm:$0xff]
        %v261 = vld [vmem:[%s1 + $0x10] sm:$0xff]
        %v262 = vld [vmem:[%s1 + $0x18] sm:$0xff]
        %v263 = vld [vmem:[%s1 + $0x20] sm:$0xff]
        %v264 = vld [vmem:[%s1 + $0x28] sm:$0xff]
        %v265 = vld [vmem:[%s1 + $0x30] sm:$0xff]
        %v266 = vld [vmem:[%s1 + $0x38] sm:$0xff]
        %v267 = vld [vmem:[%s1 + $0x40] sm:$0xff]
        %v268 = vld [vmem:[%s1 + $0x48] sm:$0xff]
        %v269 = vld [vmem:[%s1 + $0x50] sm:$0xff]
        %v270 = vld [vmem:[%s1 + $0x58] sm:$0xff]
        %v271 = vld [vmem:[%s1 + $0x60] sm:$0xff]
        %v272 = vld [vmem:[%s1 + $0x68] sm:$0xff]
        %v273 = vld [vmem:[%s1 + $0x70] sm:$0xff]
        %v274 = vld [vmem:[%s1 + $0x78] sm:$0xff]
        %275 = vmatprep.subr.mxu0 0.0
        %276 = vmatpush1.msra.mxu0 %v274
        %277 = vmatprep.subr.mxu0 0.0
        %278 = vmatpush1.msra.mxu0 %v273
        %279 = vmatprep.subr.mxu0 0.0
        %280 = vmatpush1.msra.mxu0 %v272
        %281 = vmatprep.subr.mxu0 0.0
        %282 = vmatpush1.msra.mxu0 %v271
        %283 = vmatprep.subr.mxu0 0.0
        %284 = vmatpush1.msra.mxu0 %v270
        %285 = vmatprep.subr.mxu0 0.0
        %286 = vmatpush1.msra.mxu0 %v269
        %287 = vmatprep.subr.mxu0 0.0
        %288 = vmatpush1.msra.mxu0 %v268
        %289 = vmatprep.subr.mxu0 0.0
        %290 = vmatpush1.msra.mxu0 %v267
        %291 = vmatprep.subr.mxu0 0.0
        %292 = vmatpush1.msra.mxu0 %v266
        %293 = vmatprep.subr.mxu0 0.0
        %294 = vmatpush1.msra.mxu0 %v265
        %295 = vmatprep.subr.mxu0 0.0
        %296 = vmatpush1.msra.mxu0 %v264
        %297 = vmatprep.subr.mxu0 0.0
        %298 = vmatpush1.msra.mxu0 %v263
        %299 = vmatprep.subr.mxu0 0.0
        %300 = vmatpush1.msra.mxu0 %v262
        %301 = vmatprep.subr.mxu0 0.0
        %302 = vmatpush1.msra.mxu0 %v261
        %303 = vmatprep.subr.mxu0 0.0
        %304 = vmatpush1.msra.mxu0 %v260
        %305 = vmatprep.subr.mxu0 0.0
        %306 = vmatpush1.msra.mxu0 %v259
        %307 = vmatprep.subr.mxu0 0.0
        %308 = vmatpush2.msra.mxu0 0.0
        %309 = vmatprep.subr.mxu0 0.0
        %310 = vmatpush2.msra.mxu0 0.0
        %311 = vmatprep.subr.mxu0 0.0
        %312 = vmatpush2.msra.mxu0 0.0
        %313 = vmatprep.subr.mxu0 0.0
        %314 = vmatpush2.msra.mxu0 0.0
        %315 = vmatprep.subr.mxu0 0.0
        %316 = vmatpush2.msra.mxu0 0.0
        %317 = vmatprep.subr.mxu0 0.0
        %318 = vmatpush2.msra.mxu0 0.0
        %319 = vmatprep.subr.mxu0 0.0
        %320 = vmatpush2.msra.mxu0 0.0
        %321 = vmatprep.subr.mxu0 0.0
        %322 = vmatpush2.msra.mxu0 0.0
        %323 = vmatprep.subr.mxu0 0.0
        %324 = vmatpush2.msra.mxu0 0.0
        %325 = vmatprep.subr.mxu0 0.0
        %326 = vmatpush2.msra.mxu0 0.0
        %327 = vmatprep.subr.mxu0 0.0
        %328 = vmatpush2.msra.mxu0 0.0
        %329 = vmatprep.subr.mxu0 0.0
        %330 = vmatpush2.msra.mxu0 0.0
        %331 = vmatprep.subr.mxu0 0.0
        %332 = vmatpush2.msra.mxu0 0.0
        %333 = vmatprep.subr.mxu0 0.0
        %334 = vmatpush2.msra.mxu0 0.0
        %335 = vmatprep.subr.mxu0 0.0
        %336 = vmatpush2.msra.mxu0 0.0
        %337 = vmatprep.subr.mxu0 0.0
        %338 = vmatpush2.msra.mxu0 0.0
        %339 = vmatprep.mubr.f32.mxu0 0.0
        %340 = vmatmul.mubr.f32.gmra.mxu0 %v227
        %v341 = vpop.f32.mrf.mxu0
        %v342 = vadd.f32 0.0, %v341
        %v343 = vpop.f32.mrf.mxu0
        %344 = vmatprep.mubr.f32.mxu0 0.0
        %345 = vmatmul.mubr.f32.gmra.mxu0 %v228
        %v346 = vpop.f32.mrf.mxu0
        %v347 = vadd.f32 0.0, %v346
        %v348 = vpop.f32.mrf.mxu0
        %349 = vmatprep.mubr.f32.mxu0 0.0
        %350 = vmatmul.mubr.f32.gmra.mxu0 %v229
        %v351 = vpop.f32.mrf.mxu0
        %v352 = vadd.f32 0.0, %v351
        %v353 = vpop.f32.mrf.mxu0
        %354 = vmatprep.mubr.f32.mxu0 0.0
        %355 = vmatmul.mubr.f32.gmra.mxu0 %v230
        %v356 = vpop.f32.mrf.mxu0
        %v357 = vadd.f32 0.0, %v356
        %v358 = vpop.f32.mrf.mxu0
        %359 = vmatprep.mubr.f32.mxu0 0.0
        %360 = vmatmul.mubr.f32.gmra.mxu0 %v231
        %v361 = vpop.f32.mrf.mxu0
        %v362 = vadd.f32 0.0, %v361
        %v363 = vpop.f32.mrf.mxu0
        %364 = vmatprep.mubr.f32.mxu0 0.0
        %365 = vmatmul.mubr.f32.gmra.mxu0 %v232
        %v366 = vpop.f32.mrf.mxu0
        %v367 = vadd.f32 0.0, %v366
        %v368 = vpop.f32.mrf.mxu0
        %369 = vmatprep.mubr.f32.mxu0 0.0
        %370 = vmatmul.mubr.f32.gmra.mxu0 %v233
        %v371 = vpop.f32.mrf.mxu0
        %v372 = vadd.f32 0.0, %v371
        %v373 = vpop.f32.mrf.mxu0
        %374 = vmatprep.mubr.f32.mxu0 0.0
        %375 = vmatmul.mubr.f32.gmra.mxu0 %v234
        %v376 = vpop.f32.mrf.mxu0
        %v377 = vadd.f32 0.0, %v376
        %v378 = vpop.f32.mrf.mxu0
        %379 = vmatprep.mubr.f32.mxu0 0.0
        %380 = vmatmul.mubr.f32.gmra.mxu0 %v235
        %v381 = vpop.f32.mrf.mxu0
        %v382 = vadd.f32 0.0, %v381
        %v383 = vpop.f32.mrf.mxu0
        %384 = vmatprep.mubr.f32.mxu0 0.0
        %385 = vmatmul.mubr.f32.gmra.mxu0 %v236
        %v386 = vpop.f32.mrf.mxu0
        %v387 = vadd.f32 0.0, %v386
        %v388 = vpop.f32.mrf.mxu0
        %389 = vmatprep.mubr.f32.mxu0 0.0
        %390 = vmatmul.mubr.f32.gmra.mxu0 %v237
        %v391 = vpop.f32.mrf.mxu0
        %v392 = vadd.f32 0.0, %v391
        %v393 = vpop.f32.mrf.mxu0
        %394 = vmatprep.mubr.f32.mxu0 0.0
        %395 = vmatmul.mubr.f32.gmra.mxu0 %v238
        %v396 = vpop.f32.mrf.mxu0
        %v397 = vadd.f32 0.0, %v396
        %v398 = vpop.f32.mrf.mxu0
        %399 = vmatprep.mubr.f32.mxu0 0.0
        %400 = vmatmul.mubr.f32.gmra.mxu0 %v239
        %v401 = vpop.f32.mrf.mxu0
        %v402 = vadd.f32 0.0, %v401
        %v403 = vpop.f32.mrf.mxu0
        %404 = vmatprep.mubr.f32.mxu0 0.0
        %405 = vmatmul.mubr.f32.gmra.mxu0 %v240
        %v406 = vpop.f32.mrf.mxu0
        %v407 = vadd.f32 0.0, %v406
        %v408 = vpop.f32.mrf.mxu0
        %409 = vmatprep.mubr.f32.mxu0 0.0
        %410 = vmatmul.mubr.f32.gmra.mxu0 %v241
        %v411 = vpop.f32.mrf.mxu0
        %v412 = vadd.f32 0.0, %v411
        %v413 = vpop.f32.mrf.mxu0
        %414 = vmatprep.mubr.f32.mxu0 0.0
        %415 = vmatmul.mubr.f32.gmra.mxu0 %v242
        %v416 = vpop.f32.mrf.mxu0
        %v417 = vadd.f32 0.0, %v416
        %v418 = vpop.f32.mrf.mxu0
        %419 = vdwg.mxu0
        %v420 = vadd.f32 %v243, %v342
        %v421 = vadd.f32 %v244, %v347
        %v422 = vadd.f32 %v245, %v352
        %v423 = vadd.f32 %v246, %v357
        %v424 = vadd.f32 %v247, %v362
        %v425 = vadd.f32 %v248, %v367
        %v426 = vadd.f32 %v249, %v372
        %v427 = vadd.f32 %v250, %v377
        %v428 = vadd.f32 %v251, %v382
        %v429 = vadd.f32 %v252, %v387
        %v430 = vadd.f32 %v253, %v392
        %v431 = vadd.f32 %v254, %v397
        %v432 = vadd.f32 %v255, %v402
        %v433 = vadd.f32 %v256, %v407
        %v434 = vadd.f32 %v257, %v412
        %v435 = vadd.f32 %v258, %v417
        %436 = vst [vmem:[#allocation2] sm:$0xff] %v420
        %437 = vst [vmem:[#allocation2 + $0x8] sm:$0xff] %v421
        %438 = vst [vmem:[#allocation2 + $0x10] sm:$0xff] %v422
        %439 = vst [vmem:[#allocation2 + $0x18] sm:$0xff] %v423
        %440 = vst [vmem:[#allocation2 + $0x20] sm:$0xff] %v424
        %441 = vst [vmem:[#allocation2 + $0x28] sm:$0xff] %v425
        %442 = vst [vmem:[#allocation2 + $0x30] sm:$0xff] %v426
        %443 = vst [vmem:[#allocation2 + $0x38] sm:$0xff] %v427
        %444 = vst [vmem:[#allocation2 + $0x40] sm:$0xff] %v428
        %445 = vst [vmem:[#allocation2 + $0x48] sm:$0xff] %v429
        %446 = vst [vmem:[#allocation2 + $0x50] sm:$0xff] %v430
        %447 = vst [vmem:[#allocation2 + $0x58] sm:$0xff] %v431
        %448 = vst [vmem:[#allocation2 + $0x60] sm:$0xff] %v432
        %449 = vst [vmem:[#allocation2 + $0x68] sm:$0xff] %v433
        %450 = vst [vmem:[#allocation2 + $0x70] sm:$0xff] %v434
        %451 = vst [vmem:[#allocation2 + $0x78] sm:$0xff] %v435
        %v452 = vld [vmem:[%s209 + $0x1] sm:$0xff]
        %v453 = vld [vmem:[%s209 + $0x9] sm:$0xff]
        %v454 = vld [vmem:[%s209 + $0x19] sm:$0xff]
        %v455 = vld [vmem:[%s209 + $0x21] sm:$0xff]
        %v456 = vld [vmem:[%s209 + $0x31] sm:$0xff]
        %v457 = vld [vmem:[%s209 + $0x39] sm:$0xff]
        %v458 = vld [vmem:[%s209 + $0x49] sm:$0xff]
        %v459 = vld [vmem:[%s209 + $0x51] sm:$0xff]
        %v460 = vld [vmem:[%s209 + $0x61] sm:$0xff]
        %v461 = vld [vmem:[%s209 + $0x69] sm:$0xff]
        %v462 = vld [vmem:[%s209 + $0x79] sm:$0xff]
        %v463 = vld [vmem:[%s209 + $0x81] sm:$0xff]
        %v464 = vld [vmem:[%s209 + $0x91] sm:$0xff]
        %v465 = vld [vmem:[%s209 + $0x99] sm:$0xff]
        %v466 = vld [vmem:[%s209 + $0xa9] sm:$0xff]
        %v467 = vld [vmem:[%s209 + $0xb1] sm:$0xff]
        %v468 = vld [vmem:[#allocation2] sm:$0xff]
        %v469 = vld [vmem:[#allocation2 + $0x8] sm:$0xff]
        %v470 = vld [vmem:[#allocation2 + $0x10] sm:$0xff]
        %v471 = vld [vmem:[#allocation2 + $0x18] sm:$0xff]
        %v472 = vld [vmem:[#allocation2 + $0x20] sm:$0xff]
        %v473 = vld [vmem:[#allocation2 + $0x28] sm:$0xff]
        %v474 = vld [vmem:[#allocation2 + $0x30] sm:$0xff]
        %v475 = vld [vmem:[#allocation2 + $0x38] sm:$0xff]
        %v476 = vld [vmem:[#allocation2 + $0x40] sm:$0xff]
        %v477 = vld [vmem:[#allocation2 + $0x48] sm:$0xff]
        %v478 = vld [vmem:[#allocation2 + $0x50] sm:$0xff]
        %v479 = vld [vmem:[#allocation2 + $0x58] sm:$0xff]
        %v480 = vld [vmem:[#allocation2 + $0x60] sm:$0xff]
        %v481 = vld [vmem:[#allocation2 + $0x68] sm:$0xff]
        %v482 = vld [vmem:[#allocation2 + $0x70] sm:$0xff]
        %v483 = vld [vmem:[#allocation2 + $0x78] sm:$0xff]
        %s484 = scalar_lea.vmem %s1, 128
        %v485 = vld [vmem:[%s484] sm:$0xff]
        %v486 = vld [vmem:[%s484 + $0x8] sm:$0xff]
        %v487 = vld [vmem:[%s484 + $0x10] sm:$0xff]
        %v488 = vld [vmem:[%s484 + $0x18] sm:$0xff]
        %v489 = vld [vmem:[%s484 + $0x20] sm:$0xff]
        %v490 = vld [vmem:[%s484 + $0x28] sm:$0xff]
        %v491 = vld [vmem:[%s484 + $0x30] sm:$0xff]
        %v492 = vld [vmem:[%s484 + $0x38] sm:$0xff]
        %v493 = vld [vmem:[%s484 + $0x40] sm:$0xff]
        %v494 = vld [vmem:[%s484 + $0x48] sm:$0xff]
        %v495 = vld [vmem:[%s484 + $0x50] sm:$0xff]
        %v496 = vld [vmem:[%s484 + $0x58] sm:$0xff]
        %v497 = vld [vmem:[%s484 + $0x60] sm:$0xff]
        %v498 = vld [vmem:[%s484 + $0x68] sm:$0xff]
        %v499 = vld [vmem:[%s484 + $0x70] sm:$0xff]
        %v500 = vld [vmem:[%s484 + $0x78] sm:$0xff]
        %501 = vmatprep.subr.mxu0 0.0
        %502 = vmatpush1.msra.mxu0 %v500
        %503 = vmatprep.subr.mxu0 0.0
        %504 = vmatpush1.msra.mxu0 %v499
        %505 = vmatprep.subr.mxu0 0.0
        %506 = vmatpush1.msra.mxu0 %v498
        %507 = vmatprep.subr.mxu0 0.0
        %508 = vmatpush1.msra.mxu0 %v497
        %509 = vmatprep.subr.mxu0 0.0
        %510 = vmatpush1.msra.mxu0 %v496
        %511 = vmatprep.subr.mxu0 0.0
        %512 = vmatpush1.msra.mxu0 %v495
        %513 = vmatprep.subr.mxu0 0.0
        %514 = vmatpush1.msra.mxu0 %v494
        %515 = vmatprep.subr.mxu0 0.0
        %516 = vmatpush1.msra.mxu0 %v493
        %517 = vmatprep.subr.mxu0 0.0
        %518 = vmatpush1.msra.mxu0 %v492
        %519 = vmatprep.subr.mxu0 0.0
        %520 = vmatpush1.msra.mxu0 %v491
        %521 = vmatprep.subr.mxu0 0.0
        %522 = vmatpush1.msra.mxu0 %v490
        %523 = vmatprep.subr.mxu0 0.0
        %524 = vmatpush1.msra.mxu0 %v489
        %525 = vmatprep.subr.mxu0 0.0
        %526 = vmatpush1.msra.mxu0 %v488
        %527 = vmatprep.subr.mxu0 0.0
        %528 = vmatpush1.msra.mxu0 %v487
        %529 = vmatprep.subr.mxu0 0.0
        %530 = vmatpush1.msra.mxu0 %v486
        %531 = vmatprep.subr.mxu0 0.0
        %532 = vmatpush1.msra.mxu0 %v485
        %533 = vmatprep.subr.mxu0 0.0
        %534 = vmatpush2.msra.mxu0 0.0
        %535 = vmatprep.subr.mxu0 0.0
        %536 = vmatpush2.msra.mxu0 0.0
        %537 = vmatprep.subr.mxu0 0.0
        %538 = vmatpush2.msra.mxu0 0.0
        %539 = vmatprep.subr.mxu0 0.0
        %540 = vmatpush2.msra.mxu0 0.0
        %541 = vmatprep.subr.mxu0 0.0
        %542 = vmatpush2.msra.mxu0 0.0
        %543 = vmatprep.subr.mxu0 0.0
        %544 = vmatpush2.msra.mxu0 0.0
        %545 = vmatprep.subr.mxu0 0.0
        %546 = vmatpush2.msra.mxu0 0.0
        %547 = vmatprep.subr.mxu0 0.0
        %548 = vmatpush2.msra.mxu0 0.0
        %549 = vmatprep.subr.mxu0 0.0
        %550 = vmatpush2.msra.mxu0 0.0
        %551 = vmatprep.subr.mxu0 0.0
        %552 = vmatpush2.msra.mxu0 0.0
        %553 = vmatprep.subr.mxu0 0.0
        %554 = vmatpush2.msra.mxu0 0.0
        %555 = vmatprep.subr.mxu0 0.0
        %556 = vmatpush2.msra.mxu0 0.0
        %557 = vmatprep.subr.mxu0 0.0
        %558 = vmatpush2.msra.mxu0 0.0
        %559 = vmatprep.subr.mxu0 0.0
        %560 = vmatpush2.msra.mxu0 0.0
        %561 = vmatprep.subr.mxu0 0.0
        %562 = vmatpush2.msra.mxu0 0.0
        %563 = vmatprep.subr.mxu0 0.0
        %564 = vmatpush2.msra.mxu0 0.0
        %565 = vmatprep.mubr.f32.mxu0 0.0
        %566 = vmatmul.mubr.f32.gmra.mxu0 %v452
        %v567 = vpop.f32.mrf.mxu0
        %v568 = vadd.f32 0.0, %v567
        %v569 = vpop.f32.mrf.mxu0
        %570 = vmatprep.mubr.f32.mxu0 0.0
        %571 = vmatmul.mubr.f32.gmra.mxu0 %v453
        %v572 = vpop.f32.mrf.mxu0
        %v573 = vadd.f32 0.0, %v572
        %v574 = vpop.f32.mrf.mxu0
        %575 = vmatprep.mubr.f32.mxu0 0.0
        %576 = vmatmul.mubr.f32.gmra.mxu0 %v454
        %v577 = vpop.f32.mrf.mxu0
        %v578 = vadd.f32 0.0, %v577
        %v579 = vpop.f32.mrf.mxu0
        %580 = vmatprep.mubr.f32.mxu0 0.0
        %581 = vmatmul.mubr.f32.gmra.mxu0 %v455
        %v582 = vpop.f32.mrf.mxu0
        %v583 = vadd.f32 0.0, %v582
        %v584 = vpop.f32.mrf.mxu0
        %585 = vmatprep.mubr.f32.mxu0 0.0
        %586 = vmatmul.mubr.f32.gmra.mxu0 %v456
        %v587 = vpop.f32.mrf.mxu0
        %v588 = vadd.f32 0.0, %v587
        %v589 = vpop.f32.mrf.mxu0
        %590 = vmatprep.mubr.f32.mxu0 0.0
        %591 = vmatmul.mubr.f32.gmra.mxu0 %v457
        %v592 = vpop.f32.mrf.mxu0
        %v593 = vadd.f32 0.0, %v592
        %v594 = vpop.f32.mrf.mxu0
        %595 = vmatprep.mubr.f32.mxu0 0.0
        %596 = vmatmul.mubr.f32.gmra.mxu0 %v458
        %v597 = vpop.f32.mrf.mxu0
        %v598 = vadd.f32 0.0, %v597
        %v599 = vpop.f32.mrf.mxu0
        %600 = vmatprep.mubr.f32.mxu0 0.0
        %601 = vmatmul.mubr.f32.gmra.mxu0 %v459
        %v602 = vpop.f32.mrf.mxu0
        %v603 = vadd.f32 0.0, %v602
        %v604 = vpop.f32.mrf.mxu0
        %605 = vmatprep.mubr.f32.mxu0 0.0
        %606 = vmatmul.mubr.f32.gmra.mxu0 %v460
        %v607 = vpop.f32.mrf.mxu0
        %v608 = vadd.f32 0.0, %v607
        %v609 = vpop.f32.mrf.mxu0
        %610 = vmatprep.mubr.f32.mxu0 0.0
        %611 = vmatmul.mubr.f32.gmra.mxu0 %v461
        %v612 = vpop.f32.mrf.mxu0
        %v613 = vadd.f32 0.0, %v612
        %v614 = vpop.f32.mrf.mxu0
        %615 = vmatprep.mubr.f32.mxu0 0.0
        %616 = vmatmul.mubr.f32.gmra.mxu0 %v462
        %v617 = vpop.f32.mrf.mxu0
        %v618 = vadd.f32 0.0, %v617
        %v619 = vpop.f32.mrf.mxu0
        %620 = vmatprep.mubr.f32.mxu0 0.0
        %621 = vmatmul.mubr.f32.gmra.mxu0 %v463
        %v622 = vpop.f32.mrf.mxu0
        %v623 = vadd.f32 0.0, %v622
        %v624 = vpop.f32.mrf.mxu0
        %625 = vmatprep.mubr.f32.mxu0 0.0
        %626 = vmatmul.mubr.f32.gmra.mxu0 %v464
        %v627 = vpop.f32.mrf.mxu0
        %v628 = vadd.f32 0.0, %v627
        %v629 = vpop.f32.mrf.mxu0
        %630 = vmatprep.mubr.f32.mxu0 0.0
        %631 = vmatmul.mubr.f32.gmra.mxu0 %v465
        %v632 = vpop.f32.mrf.mxu0
        %v633 = vadd.f32 0.0, %v632
        %v634 = vpop.f32.mrf.mxu0
        %635 = vmatprep.mubr.f32.mxu0 0.0
        %636 = vmatmul.mubr.f32.gmra.mxu0 %v466
        %v637 = vpop.f32.mrf.mxu0
        %v638 = vadd.f32 0.0, %v637
        %v639 = vpop.f32.mrf.mxu0
        %640 = vmatprep.mubr.f32.mxu0 0.0
        %641 = vmatmul.mubr.f32.gmra.mxu0 %v467
        %v642 = vpop.f32.mrf.mxu0
        %v643 = vadd.f32 0.0, %v642
        %v644 = vpop.f32.mrf.mxu0
        %645 = vdwg.mxu0
        %v646 = vadd.f32 %v468, %v568
        %v647 = vadd.f32 %v469, %v573
        %v648 = vadd.f32 %v470, %v578
        %v649 = vadd.f32 %v471, %v583
        %v650 = vadd.f32 %v472, %v588
        %v651 = vadd.f32 %v473, %v593
        %v652 = vadd.f32 %v474, %v598
        %v653 = vadd.f32 %v475, %v603
        %v654 = vadd.f32 %v476, %v608
        %v655 = vadd.f32 %v477, %v613
        %v656 = vadd.f32 %v478, %v618
        %v657 = vadd.f32 %v479, %v623
        %v658 = vadd.f32 %v480, %v628
        %v659 = vadd.f32 %v481, %v633
        %v660 = vadd.f32 %v482, %v638
        %v661 = vadd.f32 %v483, %v643
        %662 = vst [vmem:[#allocation2] sm:$0xff] %v646
        %663 = vst [vmem:[#allocation2 + $0x8] sm:$0xff] %v647
        %664 = vst [vmem:[#allocation2 + $0x10] sm:$0xff] %v648
        %665 = vst [vmem:[#allocation2 + $0x18] sm:$0xff] %v649
        %666 = vst [vmem:[#allocation2 + $0x20] sm:$0xff] %v650
        %667 = vst [vmem:[#allocation2 + $0x28] sm:$0xff] %v651
        %668 = vst [vmem:[#allocation2 + $0x30] sm:$0xff] %v652
        %669 = vst [vmem:[#allocation2 + $0x38] sm:$0xff] %v653
        %670 = vst [vmem:[#allocation2 + $0x40] sm:$0xff] %v654
        %671 = vst [vmem:[#allocation2 + $0x48] sm:$0xff] %v655
        %672 = vst [vmem:[#allocation2 + $0x50] sm:$0xff] %v656
        %673 = vst [vmem:[#allocation2 + $0x58] sm:$0xff] %v657
        %674 = vst [vmem:[#allocation2 + $0x60] sm:$0xff] %v658
        %675 = vst [vmem:[#allocation2 + $0x68] sm:$0xff] %v659
        %676 = vst [vmem:[#allocation2 + $0x70] sm:$0xff] %v660
        %677 = vst [vmem:[#allocation2 + $0x78] sm:$0xff] %v661
        %v678 = vld [vmem:[%s209 + $0x2] sm:$0xff]
        %v679 = vld [vmem:[%s209 + $0xa] sm:$0xff]
        %v680 = vld [vmem:[%s209 + $0x1a] sm:$0xff]
        %v681 = vld [vmem:[%s209 + $0x22] sm:$0xff]
        %v682 = vld [vmem:[%s209 + $0x32] sm:$0xff]
        %v683 = vld [vmem:[%s209 + $0x3a] sm:$0xff]
        %v684 = vld [vmem:[%s209 + $0x4a] sm:$0xff]
        %v685 = vld [vmem:[%s209 + $0x52] sm:$0xff]
        %v686 = vld [vmem:[%s209 + $0x62] sm:$0xff]
        %v687 = vld [vmem:[%s209 + $0x6a] sm:$0xff]
        %v688 = vld [vmem:[%s209 + $0x7a] sm:$0xff]
        %v689 = vld [vmem:[%s209 + $0x82] sm:$0xff]
        %v690 = vld [vmem:[%s209 + $0x92] sm:$0xff]
        %v691 = vld [vmem:[%s209 + $0x9a] sm:$0xff]
        %v692 = vld [vmem:[%s209 + $0xaa] sm:$0xff]
        %v693 = vld [vmem:[%s209 + $0xb2] sm:$0xff]
        %v694 = vld [vmem:[#allocation2] sm:$0xff]
        %v695 = vld [vmem:[#allocation2 + $0x8] sm:$0xff]
        %v696 = vld [vmem:[#allocation2 + $0x10] sm:$0xff]
        %v697 = vld [vmem:[#allocation2 + $0x18] sm:$0xff]
        %v698 = vld [vmem:[#allocation2 + $0x20] sm:$0xff]
        %v699 = vld [vmem:[#allocation2 + $0x28] sm:$0xff]
        %v700 = vld [vmem:[#allocation2 + $0x30] sm:$0xff]
        %v701 = vld [vmem:[#allocation2 + $0x38] sm:$0xff]
        %v702 = vld [vmem:[#allocation2 + $0x40] sm:$0xff]
        %v703 = vld [vmem:[#allocation2 + $0x48] sm:$0xff]
        %v704 = vld [vmem:[#allocation2 + $0x50] sm:$0xff]
        %v705 = vld [vmem:[#allocation2 + $0x58] sm:$0xff]
        %v706 = vld [vmem:[#allocation2 + $0x60] sm:$0xff]
        %v707 = vld [vmem:[#allocation2 + $0x68] sm:$0xff]
        %v708 = vld [vmem:[#allocation2 + $0x70] sm:$0xff]
        %v709 = vld [vmem:[#allocation2 + $0x78] sm:$0xff]
        %s710 = scalar_lea.vmem %s1, 256
        %v711 = vld [vmem:[%s710] sm:$0xff]
        %v712 = vld [vmem:[%s710 + $0x8] sm:$0xff]
        %v713 = vld [vmem:[%s710 + $0x10] sm:$0xff]
        %v714 = vld [vmem:[%s710 + $0x18] sm:$0xff]
        %v715 = vld [vmem:[%s710 + $0x20] sm:$0xff]
        %v716 = vld [vmem:[%s710 + $0x28] sm:$0xff]
        %v717 = vld [vmem:[%s710 + $0x30] sm:$0xff]
        %v718 = vld [vmem:[%s710 + $0x38] sm:$0xff]
        %v719 = vld [vmem:[%s710 + $0x40] sm:$0xff]
        %v720 = vld [vmem:[%s710 + $0x48] sm:$0xff]
        %v721 = vld [vmem:[%s710 + $0x50] sm:$0xff]
        %v722 = vld [vmem:[%s710 + $0x58] sm:$0xff]
        %v723 = vld [vmem:[%s710 + $0x60] sm:$0xff]
        %v724 = vld [vmem:[%s710 + $0x68] sm:$0xff]
        %v725 = vld [vmem:[%s710 + $0x70] sm:$0xff]
        %v726 = vld [vmem:[%s710 + $0x78] sm:$0xff]
        %727 = vmatprep.subr.mxu0 0.0
        %728 = vmatpush1.msra.mxu0 %v726
        %729 = vmatprep.subr.mxu0 0.0
        %730 = vmatpush1.msra.mxu0 %v725
        %731 = vmatprep.subr.mxu0 0.0
        %732 = vmatpush1.msra.mxu0 %v724
        %733 = vmatprep.subr.mxu0 0.0
        %734 = vmatpush1.msra.mxu0 %v723
        %735 = vmatprep.subr.mxu0 0.0
        %736 = vmatpush1.msra.mxu0 %v722
        %737 = vmatprep.subr.mxu0 0.0
        %738 = vmatpush1.msra.mxu0 %v721
        %739 = vmatprep.subr.mxu0 0.0
        %740 = vmatpush1.msra.mxu0 %v720
        %741 = vmatprep.subr.mxu0 0.0
        %742 = vmatpush1.msra.mxu0 %v719
        %743 = vmatprep.subr.mxu0 0.0
        %744 = vmatpush1.msra.mxu0 %v718
        %745 = vmatprep.subr.mxu0 0.0
        %746 = vmatpush1.msra.mxu0 %v717
        %747 = vmatprep.subr.mxu0 0.0
        %748 = vmatpush1.msra.mxu0 %v716
        %749 = vmatprep.subr.mxu0 0.0
        %750 = vmatpush1.msra.mxu0 %v715
        %751 = vmatprep.subr.mxu0 0.0
        %752 = vmatpush1.msra.mxu0 %v714
        %753 = vmatprep.subr.mxu0 0.0
        %754 = vmatpush1.msra.mxu0 %v713
        %755 = vmatprep.subr.mxu0 0.0
        %756 = vmatpush1.msra.mxu0 %v712
        %757 = vmatprep.subr.mxu0 0.0
        %758 = vmatpush1.msra.mxu0 %v711
        %759 = vmatprep.subr.mxu0 0.0
        %760 = vmatpush2.msra.mxu0 0.0
        %761 = vmatprep.subr.mxu0 0.0
        %762 = vmatpush2.msra.mxu0 0.0
        %763 = vmatprep.subr.mxu0 0.0
        %764 = vmatpush2.msra.mxu0 0.0
        %765 = vmatprep.subr.mxu0 0.0
        %766 = vmatpush2.msra.mxu0 0.0
        %767 = vmatprep.subr.mxu0 0.0
        %768 = vmatpush2.msra.mxu0 0.0
        %769 = vmatprep.subr.mxu0 0.0
        %770 = vmatpush2.msra.mxu0 0.0
        %771 = vmatprep.subr.mxu0 0.0
        %772 = vmatpush2.msra.mxu0 0.0
        %773 = vmatprep.subr.mxu0 0.0
        %774 = vmatpush2.msra.mxu0 0.0
        %775 = vmatprep.subr.mxu0 0.0
        %776 = vmatpush2.msra.mxu0 0.0
        %777 = vmatprep.subr.mxu0 0.0
        %778 = vmatpush2.msra.mxu0 0.0
        %779 = vmatprep.subr.mxu0 0.0
        %780 = vmatpush2.msra.mxu0 0.0
        %781 = vmatprep.subr.mxu0 0.0
        %782 = vmatpush2.msra.mxu0 0.0
        %783 = vmatprep.subr.mxu0 0.0
        %784 = vmatpush2.msra.mxu0 0.0
        %785 = vmatprep.subr.mxu0 0.0
        %786 = vmatpush2.msra.mxu0 0.0
        %787 = vmatprep.subr.mxu0 0.0
        %788 = vmatpush2.msra.mxu0 0.0
        %789 = vmatprep.subr.mxu0 0.0
        %790 = vmatpush2.msra.mxu0 0.0
        %791 = vmatprep.mubr.f32.mxu0 0.0
        %792 = vmatmul.mubr.f32.gmra.mxu0 %v678
        %v793 = vpop.f32.mrf.mxu0
        %v794 = vadd.f32 0.0, %v793
        %v795 = vpop.f32.mrf.mxu0
        %796 = vmatprep.mubr.f32.mxu0 0.0
        %797 = vmatmul.mubr.f32.gmra.mxu0 %v679
        %v798 = vpop.f32.mrf.mxu0
        %v799 = vadd.f32 0.0, %v798
        %v800 = vpop.f32.mrf.mxu0
        %801 = vmatprep.mubr.f32.mxu0 0.0
        %802 = vmatmul.mubr.f32.gmra.mxu0 %v680
        %v803 = vpop.f32.mrf.mxu0
        %v804 = vadd.f32 0.0, %v803
        %v805 = vpop.f32.mrf.mxu0
        %806 = vmatprep.mubr.f32.mxu0 0.0
        %807 = vmatmul.mubr.f32.gmra.mxu0 %v681
        %v808 = vpop.f32.mrf.mxu0
        %v809 = vadd.f32 0.0, %v808
        %v810 = vpop.f32.mrf.mxu0
        %811 = vmatprep.mubr.f32.mxu0 0.0
        %812 = vmatmul.mubr.f32.gmra.mxu0 %v682
        %v813 = vpop.f32.mrf.mxu0
        %v814 = vadd.f32 0.0, %v813
        %v815 = vpop.f32.mrf.mxu0
        %816 = vmatprep.mubr.f32.mxu0 0.0
        %817 = vmatmul.mubr.f32.gmra.mxu0 %v683
        %v818 = vpop.f32.mrf.mxu0
        %v819 = vadd.f32 0.0, %v818
        %v820 = vpop.f32.mrf.mxu0
        %821 = vmatprep.mubr.f32.mxu0 0.0
        %822 = vmatmul.mubr.f32.gmra.mxu0 %v684
        %v823 = vpop.f32.mrf.mxu0
        %v824 = vadd.f32 0.0, %v823
        %v825 = vpop.f32.mrf.mxu0
        %826 = vmatprep.mubr.f32.mxu0 0.0
        %827 = vmatmul.mubr.f32.gmra.mxu0 %v685
        %v828 = vpop.f32.mrf.mxu0
        %v829 = vadd.f32 0.0, %v828
        %v830 = vpop.f32.mrf.mxu0
        %831 = vmatprep.mubr.f32.mxu0 0.0
        %832 = vmatmul.mubr.f32.gmra.mxu0 %v686
        %v833 = vpop.f32.mrf.mxu0
        %v834 = vadd.f32 0.0, %v833
        %v835 = vpop.f32.mrf.mxu0
        %836 = vmatprep.mubr.f32.mxu0 0.0
        %837 = vmatmul.mubr.f32.gmra.mxu0 %v687
        %v838 = vpop.f32.mrf.mxu0
        %v839 = vadd.f32 0.0, %v838
        %v840 = vpop.f32.mrf.mxu0
        %841 = vmatprep.mubr.f32.mxu0 0.0
        %842 = vmatmul.mubr.f32.gmra.mxu0 %v688
        %v843 = vpop.f32.mrf.mxu0
        %v844 = vadd.f32 0.0, %v843
        %v845 = vpop.f32.mrf.mxu0
        %846 = vmatprep.mubr.f32.mxu0 0.0
        %847 = vmatmul.mubr.f32.gmra.mxu0 %v689
        %v848 = vpop.f32.mrf.mxu0
        %v849 = vadd.f32 0.0, %v848
        %v850 = vpop.f32.mrf.mxu0
        %851 = vmatprep.mubr.f32.mxu0 0.0
        %852 = vmatmul.mubr.f32.gmra.mxu0 %v690
        %v853 = vpop.f32.mrf.mxu0
        %v854 = vadd.f32 0.0, %v853
        %v855 = vpop.f32.mrf.mxu0
        %856 = vmatprep.mubr.f32.mxu0 0.0
        %857 = vmatmul.mubr.f32.gmra.mxu0 %v691
        %v858 = vpop.f32.mrf.mxu0
        %v859 = vadd.f32 0.0, %v858
        %v860 = vpop.f32.mrf.mxu0
        %861 = vmatprep.mubr.f32.mxu0 0.0
        %862 = vmatmul.mubr.f32.gmra.mxu0 %v692
        %v863 = vpop.f32.mrf.mxu0
        %v864 = vadd.f32 0.0, %v863
        %v865 = vpop.f32.mrf.mxu0
        %866 = vmatprep.mubr.f32.mxu0 0.0
        %867 = vmatmul.mubr.f32.gmra.mxu0 %v693
        %v868 = vpop.f32.mrf.mxu0
        %v869 = vadd.f32 0.0, %v868
        %v870 = vpop.f32.mrf.mxu0
        %871 = vdwg.mxu0
        %v872 = vadd.f32 %v694, %v794
        %v873 = vadd.f32 %v695, %v799
        %v874 = vadd.f32 %v696, %v804
        %v875 = vadd.f32 %v697, %v809
        %v876 = vadd.f32 %v698, %v814
        %v877 = vadd.f32 %v699, %v819
        %v878 = vadd.f32 %v700, %v824
        %v879 = vadd.f32 %v701, %v829
        %v880 = vadd.f32 %v702, %v834
        %v881 = vadd.f32 %v703, %v839
        %v882 = vadd.f32 %v704, %v844
        %v883 = vadd.f32 %v705, %v849
        %v884 = vadd.f32 %v706, %v854
        %v885 = vadd.f32 %v707, %v859
        %v886 = vadd.f32 %v708, %v864
        %v887 = vadd.f32 %v709, %v869
        %888 = vst [vmem:[#allocation2] sm:$0xff] %v872
        %889 = vst [vmem:[#allocation2 + $0x8] sm:$0xff] %v873
        %890 = vst [vmem:[#allocation2 + $0x10] sm:$0xff] %v874
        %891 = vst [vmem:[#allocation2 + $0x18] sm:$0xff] %v875
        %892 = vst [vmem:[#allocation2 + $0x20] sm:$0xff] %v876
        %893 = vst [vmem:[#allocation2 + $0x28] sm:$0xff] %v877
        %894 = vst [vmem:[#allocation2 + $0x30] sm:$0xff] %v878
        %895 = vst [vmem:[#allocation2 + $0x38] sm:$0xff] %v879
        %896 = vst [vmem:[#allocation2 + $0x40] sm:$0xff] %v880
        %897 = vst [vmem:[#allocation2 + $0x48] sm:$0xff] %v881
        %898 = vst [vmem:[#allocation2 + $0x50] sm:$0xff] %v882
        %899 = vst [vmem:[#allocation2 + $0x58] sm:$0xff] %v883
        %900 = vst [vmem:[#allocation2 + $0x60] sm:$0xff] %v884
        %901 = vst [vmem:[#allocation2 + $0x68] sm:$0xff] %v885
        %902 = vst [vmem:[#allocation2 + $0x70] sm:$0xff] %v886
        %903 = vst [vmem:[#allocation2 + $0x78] sm:$0xff] %v887
        %s904 = scalar_lea.vmem %s209, 24
        %v905 = vld [vmem:[%s904] sm:$0xff]
        %v906 = vld [vmem:[%s904 + $0x8] sm:$0xff]
        %v907 = vld [vmem:[%s904 + $0x18] sm:$0xff]
        %v908 = vld [vmem:[%s904 + $0x20] sm:$0xff]
        %v909 = vld [vmem:[%s904 + $0x30] sm:$0xff]
        %v910 = vld [vmem:[%s904 + $0x38] sm:$0xff]
        %v911 = vld [vmem:[%s904 + $0x48] sm:$0xff]
        %v912 = vld [vmem:[%s904 + $0x50] sm:$0xff]
        %v913 = vld [vmem:[%s904 + $0x60] sm:$0xff]
        %v914 = vld [vmem:[%s904 + $0x68] sm:$0xff]
        %v915 = vld [vmem:[%s904 + $0x78] sm:$0xff]
        %v916 = vld [vmem:[%s904 + $0x80] sm:$0xff]
        %v917 = vld [vmem:[%s904 + $0x90] sm:$0xff]
        %v918 = vld [vmem:[%s904 + $0x98] sm:$0xff]
        %v919 = vld [vmem:[%s904 + $0xa8] sm:$0xff]
        %v920 = vld [vmem:[%s904 + $0xb0] sm:$0xff]
        %v921 = vld [vmem:[#allocation2] sm:$0xff]
        %v922 = vld [vmem:[#allocation2 + $0x8] sm:$0xff]
        %v923 = vld [vmem:[#allocation2 + $0x10] sm:$0xff]
        %v924 = vld [vmem:[#allocation2 + $0x18] sm:$0xff]
        %v925 = vld [vmem:[#allocation2 + $0x20] sm:$0xff]
        %v926 = vld [vmem:[#allocation2 + $0x28] sm:$0xff]
        %v927 = vld [vmem:[#allocation2 + $0x30] sm:$0xff]
        %v928 = vld [vmem:[#allocation2 + $0x38] sm:$0xff]
        %v929 = vld [vmem:[#allocation2 + $0x40] sm:$0xff]
        %v930 = vld [vmem:[#allocation2 + $0x48] sm:$0xff]
        %v931 = vld [vmem:[#allocation2 + $0x50] sm:$0xff]
        %v932 = vld [vmem:[#allocation2 + $0x58] sm:$0xff]
        %v933 = vld [vmem:[#allocation2 + $0x60] sm:$0xff]
        %v934 = vld [vmem:[#allocation2 + $0x68] sm:$0xff]
        %v935 = vld [vmem:[#allocation2 + $0x70] sm:$0xff]
        %v936 = vld [vmem:[#allocation2 + $0x78] sm:$0xff]
        %s937 = scalar_lea.vmem %s1, 384
        %v938 = vld [vmem:[%s937] sm:$0xff]
        %v939 = vld [vmem:[%s937 + $0x8] sm:$0xff]
        %v940 = vld [vmem:[%s937 + $0x10] sm:$0xff]
        %v941 = vld [vmem:[%s937 + $0x18] sm:$0xff]
        %v942 = vld [vmem:[%s937 + $0x20] sm:$0xff]
        %v943 = vld [vmem:[%s937 + $0x28] sm:$0xff]
        %v944 = vld [vmem:[%s937 + $0x30] sm:$0xff]
        %v945 = vld [vmem:[%s937 + $0x38] sm:$0xff]
        %v946 = vld [vmem:[%s937 + $0x40] sm:$0xff]
        %v947 = vld [vmem:[%s937 + $0x48] sm:$0xff]
        %v948 = vld [vmem:[%s937 + $0x50] sm:$0xff]
        %v949 = vld [vmem:[%s937 + $0x58] sm:$0xff]
        %v950 = vld [vmem:[%s937 + $0x60] sm:$0xff]
        %v951 = vld [vmem:[%s937 + $0x68] sm:$0xff]
        %v952 = vld [vmem:[%s937 + $0x70] sm:$0xff]
        %v953 = vld [vmem:[%s937 + $0x78] sm:$0xff]
        %954 = vmatprep.subr.mxu0 0.0
        %955 = vmatpush1.msra.mxu0 %v953
        %956 = vmatprep.subr.mxu0 0.0
        %957 = vmatpush1.msra.mxu0 %v952
        %958 = vmatprep.subr.mxu0 0.0
        %959 = vmatpush1.msra.mxu0 %v951
        %960 = vmatprep.subr.mxu0 0.0
        %961 = vmatpush1.msra.mxu0 %v950
        %962 = vmatprep.subr.mxu0 0.0
        %963 = vmatpush1.msra.mxu0 %v949
        %964 = vmatprep.subr.mxu0 0.0
        %965 = vmatpush1.msra.mxu0 %v948
        %966 = vmatprep.subr.mxu0 0.0
        %967 = vmatpush1.msra.mxu0 %v947
        %968 = vmatprep.subr.mxu0 0.0
        %969 = vmatpush1.msra.mxu0 %v946
        %970 = vmatprep.subr.mxu0 0.0
        %971 = vmatpush1.msra.mxu0 %v945
        %972 = vmatprep.subr.mxu0 0.0
        %973 = vmatpush1.msra.mxu0 %v944
        %974 = vmatprep.subr.mxu0 0.0
        %975 = vmatpush1.msra.mxu0 %v943
        %976 = vmatprep.subr.mxu0 0.0
        %977 = vmatpush1.msra.mxu0 %v942
        %978 = vmatprep.subr.mxu0 0.0
        %979 = vmatpush1.msra.mxu0 %v941
        %980 = vmatprep.subr.mxu0 0.0
        %981 = vmatpush1.msra.mxu0 %v940
        %982 = vmatprep.subr.mxu0 0.0
        %983 = vmatpush1.msra.mxu0 %v939
        %984 = vmatprep.subr.mxu0 0.0
        %985 = vmatpush1.msra.mxu0 %v938
        %986 = vmatprep.subr.mxu0 0.0
        %987 = vmatpush2.msra.mxu0 0.0
        %988 = vmatprep.subr.mxu0 0.0
        %989 = vmatpush2.msra.mxu0 0.0
        %990 = vmatprep.subr.mxu0 0.0
        %991 = vmatpush2.msra.mxu0 0.0
        %992 = vmatprep.subr.mxu0 0.0
        %993 = vmatpush2.msra.mxu0 0.0
        %994 = vmatprep.subr.mxu0 0.0
        %995 = vmatpush2.msra.mxu0 0.0
        %996 = vmatprep.subr.mxu0 0.0
        %997 = vmatpush2.msra.mxu0 0.0
        %998 = vmatprep.subr.mxu0 0.0
        %999 = vmatpush2.msra.mxu0 0.0
        %1000 = vmatprep.subr.mxu0 0.0
        %1001 = vmatpush2.msra.mxu0 0.0
        %1002 = vmatprep.subr.mxu0 0.0
        %1003 = vmatpush2.msra.mxu0 0.0
        %1004 = vmatprep.subr.mxu0 0.0
        %1005 = vmatpush2.msra.mxu0 0.0
        %1006 = vmatprep.subr.mxu0 0.0
        %1007 = vmatpush2.msra.mxu0 0.0
        %1008 = vmatprep.subr.mxu0 0.0
        %1009 = vmatpush2.msra.mxu0 0.0
        %1010 = vmatprep.subr.mxu0 0.0
        %1011 = vmatpush2.msra.mxu0 0.0
        %1012 = vmatprep.subr.mxu0 0.0
        %1013 = vmatpush2.msra.mxu0 0.0
        %1014 = vmatprep.subr.mxu0 0.0
        %1015 = vmatpush2.msra.mxu0 0.0
        %1016 = vmatprep.subr.mxu0 0.0
        %1017 = vmatpush2.msra.mxu0 0.0
        %1018 = vmatprep.mubr.f32.mxu0 0.0
        %1019 = vmatmul.mubr.f32.gmra.mxu0 %v905
        %v1020 = vpop.f32.mrf.mxu0
        %v1021 = vadd.f32 0.0, %v1020
        %v1022 = vpop.f32.mrf.mxu0
        %1023 = vmatprep.mubr.f32.mxu0 0.0
        %1024 = vmatmul.mubr.f32.gmra.mxu0 %v906
        %v1025 = vpop.f32.mrf.mxu0
        %v1026 = vadd.f32 0.0, %v1025
        %v1027 = vpop.f32.mrf.mxu0
        %1028 = vmatprep.mubr.f32.mxu0 0.0
        %1029 = vmatmul.mubr.f32.gmra.mxu0 %v907
        %v1030 = vpop.f32.mrf.mxu0
        %v1031 = vadd.f32 0.0, %v1030
        %v1032 = vpop.f32.mrf.mxu0
        %1033 = vmatprep.mubr.f32.mxu0 0.0
        %1034 = vmatmul.mubr.f32.gmra.mxu0 %v908
        %v1035 = vpop.f32.mrf.mxu0
        %v1036 = vadd.f32 0.0, %v1035
        %v1037 = vpop.f32.mrf.mxu0
        %1038 = vmatprep.mubr.f32.mxu0 0.0
        %1039 = vmatmul.mubr.f32.gmra.mxu0 %v909
        %v1040 = vpop.f32.mrf.mxu0
        %v1041 = vadd.f32 0.0, %v1040
        %v1042 = vpop.f32.mrf.mxu0
        %1043 = vmatprep.mubr.f32.mxu0 0.0
        %1044 = vmatmul.mubr.f32.gmra.mxu0 %v910
        %v1045 = vpop.f32.mrf.mxu0
        %v1046 = vadd.f32 0.0, %v1045
        %v1047 = vpop.f32.mrf.mxu0
        %1048 = vmatprep.mubr.f32.mxu0 0.0
        %1049 = vmatmul.mubr.f32.gmra.mxu0 %v911
        %v1050 = vpop.f32.mrf.mxu0
        %v1051 = vadd.f32 0.0, %v1050
        %v1052 = vpop.f32.mrf.mxu0
        %1053 = vmatprep.mubr.f32.mxu0 0.0
        %1054 = vmatmul.mubr.f32.gmra.mxu0 %v912
        %v1055 = vpop.f32.mrf.mxu0
        %v1056 = vadd.f32 0.0, %v1055
        %v1057 = vpop.f32.mrf.mxu0
        %1058 = vmatprep.mubr.f32.mxu0 0.0
        %1059 = vmatmul.mubr.f32.gmra.mxu0 %v913
        %v1060 = vpop.f32.mrf.mxu0
        %v1061 = vadd.f32 0.0, %v1060
        %v1062 = vpop.f32.mrf.mxu0
        %1063 = vmatprep.mubr.f32.mxu0 0.0
        %1064 = vmatmul.mubr.f32.gmra.mxu0 %v914
        %v1065 = vpop.f32.mrf.mxu0
        %v1066 = vadd.f32 0.0, %v1065
        %v1067 = vpop.f32.mrf.mxu0
        %1068 = vmatprep.mubr.f32.mxu0 0.0
        %1069 = vmatmul.mubr.f32.gmra.mxu0 %v915
        %v1070 = vpop.f32.mrf.mxu0
        %v1071 = vadd.f32 0.0, %v1070
        %v1072 = vpop.f32.mrf.mxu0
        %1073 = vmatprep.mubr.f32.mxu0 0.0
        %1074 = vmatmul.mubr.f32.gmra.mxu0 %v916
        %v1075 = vpop.f32.mrf.mxu0
        %v1076 = vadd.f32 0.0, %v1075
        %v1077 = vpop.f32.mrf.mxu0
        %1078 = vmatprep.mubr.f32.mxu0 0.0
        %1079 = vmatmul.mubr.f32.gmra.mxu0 %v917
        %v1080 = vpop.f32.mrf.mxu0
        %v1081 = vadd.f32 0.0, %v1080
        %v1082 = vpop.f32.mrf.mxu0
        %1083 = vmatprep.mubr.f32.mxu0 0.0
        %1084 = vmatmul.mubr.f32.gmra.mxu0 %v918
        %v1085 = vpop.f32.mrf.mxu0
        %v1086 = vadd.f32 0.0, %v1085
        %v1087 = vpop.f32.mrf.mxu0
        %1088 = vmatprep.mubr.f32.mxu0 0.0
        %1089 = vmatmul.mubr.f32.gmra.mxu0 %v919
        %v1090 = vpop.f32.mrf.mxu0
        %v1091 = vadd.f32 0.0, %v1090
        %v1092 = vpop.f32.mrf.mxu0
        %1093 = vmatprep.mubr.f32.mxu0 0.0
        %1094 = vmatmul.mubr.f32.gmra.mxu0 %v920
        %v1095 = vpop.f32.mrf.mxu0
        %v1096 = vadd.f32 0.0, %v1095
        %v1097 = vpop.f32.mrf.mxu0
        %1098 = vdwg.mxu0
        %v1099 = vadd.f32 %v921, %v1021
        %v1100 = vadd.f32 %v922, %v1026
        %v1101 = vadd.f32 %v923, %v1031
        %v1102 = vadd.f32 %v924, %v1036
        %v1103 = vadd.f32 %v925, %v1041
        %v1104 = vadd.f32 %v926, %v1046
        %v1105 = vadd.f32 %v927, %v1051
        %v1106 = vadd.f32 %v928, %v1056
        %v1107 = vadd.f32 %v929, %v1061
        %v1108 = vadd.f32 %v930, %v1066
        %v1109 = vadd.f32 %v931, %v1071
        %v1110 = vadd.f32 %v932, %v1076
        %v1111 = vadd.f32 %v933, %v1081
        %v1112 = vadd.f32 %v934, %v1086
        %v1113 = vadd.f32 %v935, %v1091
        %v1114 = vadd.f32 %v936, %v1096
        %1115 = vst [vmem:[#allocation2] sm:$0xff] %v1099
        %1116 = vst [vmem:[#allocation2 + $0x8] sm:$0xff] %v1100
        %1117 = vst [vmem:[#allocation2 + $0x10] sm:$0xff] %v1101
        %1118 = vst [vmem:[#allocation2 + $0x18] sm:$0xff] %v1102
        %1119 = vst [vmem:[#allocation2 + $0x20] sm:$0xff] %v1103
        %1120 = vst [vmem:[#allocation2 + $0x28] sm:$0xff] %v1104
        %1121 = vst [vmem:[#allocation2 + $0x30] sm:$0xff] %v1105
        %1122 = vst [vmem:[#allocation2 + $0x38] sm:$0xff] %v1106
        %1123 = vst [vmem:[#allocation2 + $0x40] sm:$0xff] %v1107
        %1124 = vst [vmem:[#allocation2 + $0x48] sm:$0xff] %v1108
        %1125 = vst [vmem:[#allocation2 + $0x50] sm:$0xff] %v1109
        %1126 = vst [vmem:[#allocation2 + $0x58] sm:$0xff] %v1110
        %1127 = vst [vmem:[#allocation2 + $0x60] sm:$0xff] %v1111
        %1128 = vst [vmem:[#allocation2 + $0x68] sm:$0xff] %v1112
        %1129 = vst [vmem:[#allocation2 + $0x70] sm:$0xff] %v1113
        %1130 = vst [vmem:[#allocation2 + $0x78] sm:$0xff] %v1114
        %v1131 = vld [vmem:[%s904 + $0x1] sm:$0xff]
        %v1132 = vld [vmem:[%s904 + $0x9] sm:$0xff]
        %v1133 = vld [vmem:[%s904 + $0x19] sm:$0xff]
        %v1134 = vld [vmem:[%s904 + $0x21] sm:$0xff]
        %v1135 = vld [vmem:[%s904 + $0x31] sm:$0xff]
        %v1136 = vld [vmem:[%s904 + $0x39] sm:$0xff]
        %v1137 = vld [vmem:[%s904 + $0x49] sm:$0xff]
        %v1138 = vld [vmem:[%s904 + $0x51] sm:$0xff]
        %v1139 = vld [vmem:[%s904 + $0x61] sm:$0xff]
        %v1140 = vld [vmem:[%s904 + $0x69] sm:$0xff]
        %v1141 = vld [vmem:[%s904 + $0x79] sm:$0xff]
        %v1142 = vld [vmem:[%s904 + $0x81] sm:$0xff]
        %v1143 = vld [vmem:[%s904 + $0x91] sm:$0xff]
        %v1144 = vld [vmem:[%s904 + $0x99] sm:$0xff]
        %v1145 = vld [vmem:[%s904 + $0xa9] sm:$0xff]
        %v1146 = vld [vmem:[%s904 + $0xb1] sm:$0xff]
        %v1147 = vld [vmem:[#allocation2] sm:$0xff]
        %v1148 = vld [vmem:[#allocation2 + $0x8] sm:$0xff]
        %v1149 = vld [vmem:[#allocation2 + $0x10] sm:$0xff]
        %v1150 = vld [vmem:[#allocation2 + $0x18] sm:$0xff]
        %v1151 = vld [vmem:[#allocation2 + $0x20] sm:$0xff]
        %v1152 = vld [vmem:[#allocation2 + $0x28] sm:$0xff]
        %v1153 = vld [vmem:[#allocation2 + $0x30] sm:$0xff]
        %v1154 = vld [vmem:[#allocation2 + $0x38] sm:$0xff]
        %v1155 = vld [vmem:[#allocation2 + $0x40] sm:$0xff]
        %v1156 = vld [vmem:[#allocation2 + $0x48] sm:$0xff]
        %v1157 = vld [vmem:[#allocation2 + $0x50] sm:$0xff]
        %v1158 = vld [vmem:[#allocation2 + $0x58] sm:$0xff]
        %v1159 = vld [vmem:[#allocation2 + $0x60] sm:$0xff]
        %v1160 = vld [vmem:[#allocation2 + $0x68] sm:$0xff]
        %v1161 = vld [vmem:[#allocation2 + $0x70] sm:$0xff]
        %v1162 = vld [vmem:[#allocation2 + $0x78] sm:$0xff]
        %s1163 = scalar_lea.vmem %s1, 512
        %v1164 = vld [vmem:[%s1163] sm:$0xff]
        %v1165 = vld [vmem:[%s1163 + $0x8] sm:$0xff]
        %v1166 = vld [vmem:[%s1163 + $0x10] sm:$0xff]
        %v1167 = vld [vmem:[%s1163 + $0x18] sm:$0xff]
        %v1168 = vld [vmem:[%s1163 + $0x20] sm:$0xff]
        %v1169 = vld [vmem:[%s1163 + $0x28] sm:$0xff]
        %v1170 = vld [vmem:[%s1163 + $0x30] sm:$0xff]
        %v1171 = vld [vmem:[%s1163 + $0x38] sm:$0xff]
        %v1172 = vld [vmem:[%s1163 + $0x40] sm:$0xff]
        %v1173 = vld [vmem:[%s1163 + $0x48] sm:$0xff]
        %v1174 = vld [vmem:[%s1163 + $0x50] sm:$0xff]
        %v1175 = vld [vmem:[%s1163 + $0x58] sm:$0xff]
        %v1176 = vld [vmem:[%s1163 + $0x60] sm:$0xff]
        %v1177 = vld [vmem:[%s1163 + $0x68] sm:$0xff]
        %v1178 = vld [vmem:[%s1163 + $0x70] sm:$0xff]
        %v1179 = vld [vmem:[%s1163 + $0x78] sm:$0xff]
        %1180 = vmatprep.subr.mxu0 0.0
        %1181 = vmatpush1.msra.mxu0 %v1179
        %1182 = vmatprep.subr.mxu0 0.0
        %1183 = vmatpush1.msra.mxu0 %v1178
        %1184 = vmatprep.subr.mxu0 0.0
        %1185 = vmatpush1.msra.mxu0 %v1177
        %1186 = vmatprep.subr.mxu0 0.0
        %1187 = vmatpush1.msra.mxu0 %v1176
        %1188 = vmatprep.subr.mxu0 0.0
        %1189 = vmatpush1.msra.mxu0 %v1175
        %1190 = vmatprep.subr.mxu0 0.0
        %1191 = vmatpush1.msra.mxu0 %v1174
        %1192 = vmatprep.subr.mxu0 0.0
        %1193 = vmatpush1.msra.mxu0 %v1173
        %1194 = vmatprep.subr.mxu0 0.0
        %1195 = vmatpush1.msra.mxu0 %v1172
        %1196 = vmatprep.subr.mxu0 0.0
        %1197 = vmatpush1.msra.mxu0 %v1171
        %1198 = vmatprep.subr.mxu0 0.0
        %1199 = vmatpush1.msra.mxu0 %v1170
        %1200 = vmatprep.subr.mxu0 0.0
        %1201 = vmatpush1.msra.mxu0 %v1169
        %1202 = vmatprep.subr.mxu0 0.0
        %1203 = vmatpush1.msra.mxu0 %v1168
        %1204 = vmatprep.subr.mxu0 0.0
        %1205 = vmatpush1.msra.mxu0 %v1167
        %1206 = vmatprep.subr.mxu0 0.0
        %1207 = vmatpush1.msra.mxu0 %v1166
        %1208 = vmatprep.subr.mxu0 0.0
        %1209 = vmatpush1.msra.mxu0 %v1165
        %1210 = vmatprep.subr.mxu0 0.0
        %1211 = vmatpush1.msra.mxu0 %v1164
        %1212 = vmatprep.subr.mxu0 0.0
        %1213 = vmatpush2.msra.mxu0 0.0
        %1214 = vmatprep.subr.mxu0 0.0
        %1215 = vmatpush2.msra.mxu0 0.0
        %1216 = vmatprep.subr.mxu0 0.0
        %1217 = vmatpush2.msra.mxu0 0.0
        %1218 = vmatprep.subr.mxu0 0.0
        %1219 = vmatpush2.msra.mxu0 0.0
        %1220 = vmatprep.subr.mxu0 0.0
        %1221 = vmatpush2.msra.mxu0 0.0
        %1222 = vmatprep.subr.mxu0 0.0
        %1223 = vmatpush2.msra.mxu0 0.0
        %1224 = vmatprep.subr.mxu0 0.0
        %1225 = vmatpush2.msra.mxu0 0.0
        %1226 = vmatprep.subr.mxu0 0.0
        %1227 = vmatpush2.msra.mxu0 0.0
        %1228 = vmatprep.subr.mxu0 0.0
        %1229 = vmatpush2.msra.mxu0 0.0
        %1230 = vmatprep.subr.mxu0 0.0
        %1231 = vmatpush2.msra.mxu0 0.0
        %1232 = vmatprep.subr.mxu0 0.0
        %1233 = vmatpush2.msra.mxu0 0.0
        %1234 = vmatprep.subr.mxu0 0.0
        %1235 = vmatpush2.msra.mxu0 0.0
        %1236 = vmatprep.subr.mxu0 0.0
        %1237 = vmatpush2.msra.mxu0 0.0
        %1238 = vmatprep.subr.mxu0 0.0
        %1239 = vmatpush2.msra.mxu0 0.0
        %1240 = vmatprep.subr.mxu0 0.0
        %1241 = vmatpush2.msra.mxu0 0.0
        %1242 = vmatprep.subr.mxu0 0.0
        %1243 = vmatpush2.msra.mxu0 0.0
        %1244 = vmatprep.mubr.f32.mxu0 0.0
        %1245 = vmatmul.mubr.f32.gmra.mxu0 %v1131
        %v1246 = vpop.f32.mrf.mxu0
        %v1247 = vadd.f32 0.0, %v1246
        %v1248 = vpop.f32.mrf.mxu0
        %1249 = vmatprep.mubr.f32.mxu0 0.0
        %1250 = vmatmul.mubr.f32.gmra.mxu0 %v1132
        %v1251 = vpop.f32.mrf.mxu0
        %v1252 = vadd.f32 0.0, %v1251
        %v1253 = vpop.f32.mrf.mxu0
        %1254 = vmatprep.mubr.f32.mxu0 0.0
        %1255 = vmatmul.mubr.f32.gmra.mxu0 %v1133
        %v1256 = vpop.f32.mrf.mxu0
        %v1257 = vadd.f32 0.0, %v1256
        %v1258 = vpop.f32.mrf.mxu0
        %1259 = vmatprep.mubr.f32.mxu0 0.0
        %1260 = vmatmul.mubr.f32.gmra.mxu0 %v1134
        %v1261 = vpop.f32.mrf.mxu0
        %v1262 = vadd.f32 0.0, %v1261
        %v1263 = vpop.f32.mrf.mxu0
        %1264 = vmatprep.mubr.f32.mxu0 0.0
        %1265 = vmatmul.mubr.f32.gmra.mxu0 %v1135
        %v1266 = vpop.f32.mrf.mxu0
        %v1267 = vadd.f32 0.0, %v1266
        %v1268 = vpop.f32.mrf.mxu0
        %1269 = vmatprep.mubr.f32.mxu0 0.0
        %1270 = vmatmul.mubr.f32.gmra.mxu0 %v1136
        %v1271 = vpop.f32.mrf.mxu0
        %v1272 = vadd.f32 0.0, %v1271
        %v1273 = vpop.f32.mrf.mxu0
        %1274 = vmatprep.mubr.f32.mxu0 0.0
        %1275 = vmatmul.mubr.f32.gmra.mxu0 %v1137
        %v1276 = vpop.f32.mrf.mxu0
        %v1277 = vadd.f32 0.0, %v1276
        %v1278 = vpop.f32.mrf.mxu0
        %1279 = vmatprep.mubr.f32.mxu0 0.0
        %1280 = vmatmul.mubr.f32.gmra.mxu0 %v1138
        %v1281 = vpop.f32.mrf.mxu0
        %v1282 = vadd.f32 0.0, %v1281
        %v1283 = vpop.f32.mrf.mxu0
        %1284 = vmatprep.mubr.f32.mxu0 0.0
        %1285 = vmatmul.mubr.f32.gmra.mxu0 %v1139
        %v1286 = vpop.f32.mrf.mxu0
        %v1287 = vadd.f32 0.0, %v1286
        %v1288 = vpop.f32.mrf.mxu0
        %1289 = vmatprep.mubr.f32.mxu0 0.0
        %1290 = vmatmul.mubr.f32.gmra.mxu0 %v1140
        %v1291 = vpop.f32.mrf.mxu0
        %v1292 = vadd.f32 0.0, %v1291
        %v1293 = vpop.f32.mrf.mxu0
        %1294 = vmatprep.mubr.f32.mxu0 0.0
        %1295 = vmatmul.mubr.f32.gmra.mxu0 %v1141
        %v1296 = vpop.f32.mrf.mxu0
        %v1297 = vadd.f32 0.0, %v1296
        %v1298 = vpop.f32.mrf.mxu0
        %1299 = vmatprep.mubr.f32.mxu0 0.0
        %1300 = vmatmul.mubr.f32.gmra.mxu0 %v1142
        %v1301 = vpop.f32.mrf.mxu0
        %v1302 = vadd.f32 0.0, %v1301
        %v1303 = vpop.f32.mrf.mxu0
        %1304 = vmatprep.mubr.f32.mxu0 0.0
        %1305 = vmatmul.mubr.f32.gmra.mxu0 %v1143
        %v1306 = vpop.f32.mrf.mxu0
        %v1307 = vadd.f32 0.0, %v1306
        %v1308 = vpop.f32.mrf.mxu0
        %1309 = vmatprep.mubr.f32.mxu0 0.0
        %1310 = vmatmul.mubr.f32.gmra.mxu0 %v1144
        %v1311 = vpop.f32.mrf.mxu0
        %v1312 = vadd.f32 0.0, %v1311
        %v1313 = vpop.f32.mrf.mxu0
        %1314 = vmatprep.mubr.f32.mxu0 0.0
        %1315 = vmatmul.mubr.f32.gmra.mxu0 %v1145
        %v1316 = vpop.f32.mrf.mxu0
        %v1317 = vadd.f32 0.0, %v1316
        %v1318 = vpop.f32.mrf.mxu0
        %1319 = vmatprep.mubr.f32.mxu0 0.0
        %1320 = vmatmul.mubr.f32.gmra.mxu0 %v1146
        %v1321 = vpop.f32.mrf.mxu0
        %v1322 = vadd.f32 0.0, %v1321
        %v1323 = vpop.f32.mrf.mxu0
        %1324 = vdwg.mxu0
        %v1325 = vadd.f32 %v1147, %v1247
        %v1326 = vadd.f32 %v1148, %v1252
        %v1327 = vadd.f32 %v1149, %v1257
        %v1328 = vadd.f32 %v1150, %v1262
        %v1329 = vadd.f32 %v1151, %v1267
        %v1330 = vadd.f32 %v1152, %v1272
        %v1331 = vadd.f32 %v1153, %v1277
        %v1332 = vadd.f32 %v1154, %v1282
        %v1333 = vadd.f32 %v1155, %v1287
        %v1334 = vadd.f32 %v1156, %v1292
        %v1335 = vadd.f32 %v1157, %v1297
        %v1336 = vadd.f32 %v1158, %v1302
        %v1337 = vadd.f32 %v1159, %v1307
        %v1338 = vadd.f32 %v1160, %v1312
        %v1339 = vadd.f32 %v1161, %v1317
        %v1340 = vadd.f32 %v1162, %v1322
        %1341 = vst [vmem:[#allocation2] sm:$0xff] %v1325
        %1342 = vst [vmem:[#allocation2 + $0x8] sm:$0xff] %v1326
        %1343 = vst [vmem:[#allocation2 + $0x10] sm:$0xff] %v1327
        %1344 = vst [vmem:[#allocation2 + $0x18] sm:$0xff] %v1328
        %1345 = vst [vmem:[#allocation2 + $0x20] sm:$0xff] %v1329
        %1346 = vst [vmem:[#allocation2 + $0x28] sm:$0xff] %v1330
        %1347 = vst [vmem:[#allocation2 + $0x30] sm:$0xff] %v1331
        %1348 = vst [vmem:[#allocation2 + $0x38] sm:$0xff] %v1332
        %1349 = vst [vmem:[#allocation2 + $0x40] sm:$0xff] %v1333
        %1350 = vst [vmem:[#allocation2 + $0x48] sm:$0xff] %v1334
        %1351 = vst [vmem:[#allocation2 + $0x50] sm:$0xff] %v1335
        %1352 = vst [vmem:[#allocation2 + $0x58] sm:$0xff] %v1336
        %1353 = vst [vmem:[#allocation2 + $0x60] sm:$0xff] %v1337
        %1354 = vst [vmem:[#allocation2 + $0x68] sm:$0xff] %v1338
        %1355 = vst [vmem:[#allocation2 + $0x70] sm:$0xff] %v1339
        %1356 = vst [vmem:[#allocation2 + $0x78] sm:$0xff] %v1340
        %v1357 = vld [vmem:[%s904 + $0x2] sm:$0xff]
        %v1358 = vld [vmem:[%s904 + $0xa] sm:$0xff]
        %v1359 = vld [vmem:[%s904 + $0x1a] sm:$0xff]
        %v1360 = vld [vmem:[%s904 + $0x22] sm:$0xff]
        %v1361 = vld [vmem:[%s904 + $0x32] sm:$0xff]
        %v1362 = vld [vmem:[%s904 + $0x3a] sm:$0xff]
        %v1363 = vld [vmem:[%s904 + $0x4a] sm:$0xff]
        %v1364 = vld [vmem:[%s904 + $0x52] sm:$0xff]
        %v1365 = vld [vmem:[%s904 + $0x62] sm:$0xff]
        %v1366 = vld [vmem:[%s904 + $0x6a] sm:$0xff]
        %v1367 = vld [vmem:[%s904 + $0x7a] sm:$0xff]
        %v1368 = vld [vmem:[%s904 + $0x82] sm:$0xff]
        %v1369 = vld [vmem:[%s904 + $0x92] sm:$0xff]
        %v1370 = vld [vmem:[%s904 + $0x9a] sm:$0xff]
        %v1371 = vld [vmem:[%s904 + $0xaa] sm:$0xff]
        %v1372 = vld [vmem:[%s904 + $0xb2] sm:$0xff]
        %v1373 = vld [vmem:[#allocation2] sm:$0xff]
        %v1374 = vld [vmem:[#allocation2 + $0x8] sm:$0xff]
        %v1375 = vld [vmem:[#allocation2 + $0x10] sm:$0xff]
        %v1376 = vld [vmem:[#allocation2 + $0x18] sm:$0xff]
        %v1377 = vld [vmem:[#allocation2 + $0x20] sm:$0xff]
        %v1378 = vld [vmem:[#allocation2 + $0x28] sm:$0xff]
        %v1379 = vld [vmem:[#allocation2 + $0x30] sm:$0xff]
        %v1380 = vld [vmem:[#allocation2 + $0x38] sm:$0xff]
        %v1381 = vld [vmem:[#allocation2 + $0x40] sm:$0xff]
        %v1382 = vld [vmem:[#allocation2 + $0x48] sm:$0xff]
        %v1383 = vld [vmem:[#allocation2 + $0x50] sm:$0xff]
        %v1384 = vld [vmem:[#allocation2 + $0x58] sm:$0xff]
        %v1385 = vld [vmem:[#allocation2 + $0x60] sm:$0xff]
        %v1386 = vld [vmem:[#allocation2 + $0x68] sm:$0xff]
        %v1387 = vld [vmem:[#allocation2 + $0x70] sm:$0xff]
        %v1388 = vld [vmem:[#allocation2 + $0x78] sm:$0xff]
        %s1389 = scalar_lea.vmem %s1, 640
        %v1390 = vld [vmem:[%s1389] sm:$0xff]
        %v1391 = vld [vmem:[%s1389 + $0x8] sm:$0xff]
        %v1392 = vld [vmem:[%s1389 + $0x10] sm:$0xff]
        %v1393 = vld [vmem:[%s1389 + $0x18] sm:$0xff]
        %v1394 = vld [vmem:[%s1389 + $0x20] sm:$0xff]
        %v1395 = vld [vmem:[%s1389 + $0x28] sm:$0xff]
        %v1396 = vld [vmem:[%s1389 + $0x30] sm:$0xff]
        %v1397 = vld [vmem:[%s1389 + $0x38] sm:$0xff]
        %v1398 = vld [vmem:[%s1389 + $0x40] sm:$0xff]
        %v1399 = vld [vmem:[%s1389 + $0x48] sm:$0xff]
        %v1400 = vld [vmem:[%s1389 + $0x50] sm:$0xff]
        %v1401 = vld [vmem:[%s1389 + $0x58] sm:$0xff]
        %v1402 = vld [vmem:[%s1389 + $0x60] sm:$0xff]
        %v1403 = vld [vmem:[%s1389 + $0x68] sm:$0xff]
        %v1404 = vld [vmem:[%s1389 + $0x70] sm:$0xff]
        %v1405 = vld [vmem:[%s1389 + $0x78] sm:$0xff]
        %1406 = vmatprep.subr.mxu0 0.0
        %1407 = vmatpush1.msra.mxu0 %v1405
        %1408 = vmatprep.subr.mxu0 0.0
        %1409 = vmatpush1.msra.mxu0 %v1404
        %1410 = vmatprep.subr.mxu0 0.0
        %1411 = vmatpush1.msra.mxu0 %v1403
        %1412 = vmatprep.subr.mxu0 0.0
        %1413 = vmatpush1.msra.mxu0 %v1402
        %1414 = vmatprep.subr.mxu0 0.0
        %1415 = vmatpush1.msra.mxu0 %v1401
        %1416 = vmatprep.subr.mxu0 0.0
        %1417 = vmatpush1.msra.mxu0 %v1400
        %1418 = vmatprep.subr.mxu0 0.0
        %1419 = vmatpush1.msra.mxu0 %v1399
        %1420 = vmatprep.subr.mxu0 0.0
        %1421 = vmatpush1.msra.mxu0 %v1398
        %1422 = vmatprep.subr.mxu0 0.0
        %1423 = vmatpush1.msra.mxu0 %v1397
        %1424 = vmatprep.subr.mxu0 0.0
        %1425 = vmatpush1.msra.mxu0 %v1396
        %1426 = vmatprep.subr.mxu0 0.0
        %1427 = vmatpush1.msra.mxu0 %v1395
        %1428 = vmatprep.subr.mxu0 0.0
        %1429 = vmatpush1.msra.mxu0 %v1394
        %1430 = vmatprep.subr.mxu0 0.0
        %1431 = vmatpush1.msra.mxu0 %v1393
        %1432 = vmatprep.subr.mxu0 0.0
        %1433 = vmatpush1.msra.mxu0 %v1392
        %1434 = vmatprep.subr.mxu0 0.0
        %1435 = vmatpush1.msra.mxu0 %v1391
        %1436 = vmatprep.subr.mxu0 0.0
        %1437 = vmatpush1.msra.mxu0 %v1390
        %1438 = vmatprep.subr.mxu0 0.0
        %1439 = vmatpush2.msra.mxu0 0.0
        %1440 = vmatprep.subr.mxu0 0.0
        %1441 = vmatpush2.msra.mxu0 0.0
        %1442 = vmatprep.subr.mxu0 0.0
        %1443 = vmatpush2.msra.mxu0 0.0
        %1444 = vmatprep.subr.mxu0 0.0
        %1445 = vmatpush2.msra.mxu0 0.0
        %1446 = vmatprep.subr.mxu0 0.0
        %1447 = vmatpush2.msra.mxu0 0.0
        %1448 = vmatprep.subr.mxu0 0.0
        %1449 = vmatpush2.msra.mxu0 0.0
        %1450 = vmatprep.subr.mxu0 0.0
        %1451 = vmatpush2.msra.mxu0 0.0
        %1452 = vmatprep.subr.mxu0 0.0
        %1453 = vmatpush2.msra.mxu0 0.0
        %1454 = vmatprep.subr.mxu0 0.0
        %1455 = vmatpush2.msra.mxu0 0.0
        %1456 = vmatprep.subr.mxu0 0.0
        %1457 = vmatpush2.msra.mxu0 0.0
        %1458 = vmatprep.subr.mxu0 0.0
        %1459 = vmatpush2.msra.mxu0 0.0
        %1460 = vmatprep.subr.mxu0 0.0
        %1461 = vmatpush2.msra.mxu0 0.0
        %1462 = vmatprep.subr.mxu0 0.0
        %1463 = vmatpush2.msra.mxu0 0.0
        %1464 = vmatprep.subr.mxu0 0.0
        %1465 = vmatpush2.msra.mxu0 0.0
        %1466 = vmatprep.subr.mxu0 0.0
        %1467 = vmatpush2.msra.mxu0 0.0
        %1468 = vmatprep.subr.mxu0 0.0
        %1469 = vmatpush2.msra.mxu0 0.0
        %1470 = vmatprep.mubr.f32.mxu0 0.0
        %1471 = vmatmul.mubr.f32.gmra.mxu0 %v1357
        %v1472 = vpop.f32.mrf.mxu0
        %v1473 = vadd.f32 0.0, %v1472
        %v1474 = vpop.f32.mrf.mxu0
        %1475 = vmatprep.mubr.f32.mxu0 0.0
        %1476 = vmatmul.mubr.f32.gmra.mxu0 %v1358
        %v1477 = vpop.f32.mrf.mxu0
        %v1478 = vadd.f32 0.0, %v1477
        %v1479 = vpop.f32.mrf.mxu0
        %1480 = vmatprep.mubr.f32.mxu0 0.0
        %1481 = vmatmul.mubr.f32.gmra.mxu0 %v1359
        %v1482 = vpop.f32.mrf.mxu0
        %v1483 = vadd.f32 0.0, %v1482
        %v1484 = vpop.f32.mrf.mxu0
        %1485 = vmatprep.mubr.f32.mxu0 0.0
        %1486 = vmatmul.mubr.f32.gmra.mxu0 %v1360
        %v1487 = vpop.f32.mrf.mxu0
        %v1488 = vadd.f32 0.0, %v1487
        %v1489 = vpop.f32.mrf.mxu0
        %1490 = vmatprep.mubr.f32.mxu0 0.0
        %1491 = vmatmul.mubr.f32.gmra.mxu0 %v1361
        %v1492 = vpop.f32.mrf.mxu0
        %v1493 = vadd.f32 0.0, %v1492
        %v1494 = vpop.f32.mrf.mxu0
        %1495 = vmatprep.mubr.f32.mxu0 0.0
        %1496 = vmatmul.mubr.f32.gmra.mxu0 %v1362
        %v1497 = vpop.f32.mrf.mxu0
        %v1498 = vadd.f32 0.0, %v1497
        %v1499 = vpop.f32.mrf.mxu0
        %1500 = vmatprep.mubr.f32.mxu0 0.0
        %1501 = vmatmul.mubr.f32.gmra.mxu0 %v1363
        %v1502 = vpop.f32.mrf.mxu0
        %v1503 = vadd.f32 0.0, %v1502
        %v1504 = vpop.f32.mrf.mxu0
        %1505 = vmatprep.mubr.f32.mxu0 0.0
        %1506 = vmatmul.mubr.f32.gmra.mxu0 %v1364
        %v1507 = vpop.f32.mrf.mxu0
        %v1508 = vadd.f32 0.0, %v1507
        %v1509 = vpop.f32.mrf.mxu0
        %1510 = vmatprep.mubr.f32.mxu0 0.0
        %1511 = vmatmul.mubr.f32.gmra.mxu0 %v1365
        %v1512 = vpop.f32.mrf.mxu0
        %v1513 = vadd.f32 0.0, %v1512
        %v1514 = vpop.f32.mrf.mxu0
        %1515 = vmatprep.mubr.f32.mxu0 0.0
        %1516 = vmatmul.mubr.f32.gmra.mxu0 %v1366
        %v1517 = vpop.f32.mrf.mxu0
        %v1518 = vadd.f32 0.0, %v1517
        %v1519 = vpop.f32.mrf.mxu0
        %1520 = vmatprep.mubr.f32.mxu0 0.0
        %1521 = vmatmul.mubr.f32.gmra.mxu0 %v1367
        %v1522 = vpop.f32.mrf.mxu0
        %v1523 = vadd.f32 0.0, %v1522
        %v1524 = vpop.f32.mrf.mxu0
        %1525 = vmatprep.mubr.f32.mxu0 0.0
        %1526 = vmatmul.mubr.f32.gmra.mxu0 %v1368
        %v1527 = vpop.f32.mrf.mxu0
        %v1528 = vadd.f32 0.0, %v1527
        %v1529 = vpop.f32.mrf.mxu0
        %1530 = vmatprep.mubr.f32.mxu0 0.0
        %1531 = vmatmul.mubr.f32.gmra.mxu0 %v1369
        %v1532 = vpop.f32.mrf.mxu0
        %v1533 = vadd.f32 0.0, %v1532
        %v1534 = vpop.f32.mrf.mxu0
        %1535 = vmatprep.mubr.f32.mxu0 0.0
        %1536 = vmatmul.mubr.f32.gmra.mxu0 %v1370
        %v1537 = vpop.f32.mrf.mxu0
        %v1538 = vadd.f32 0.0, %v1537
        %v1539 = vpop.f32.mrf.mxu0
        %1540 = vmatprep.mubr.f32.mxu0 0.0
        %1541 = vmatmul.mubr.f32.gmra.mxu0 %v1371
        %v1542 = vpop.f32.mrf.mxu0
        %v1543 = vadd.f32 0.0, %v1542
        %v1544 = vpop.f32.mrf.mxu0
        %1545 = vmatprep.mubr.f32.mxu0 0.0
        %1546 = vmatmul.mubr.f32.gmra.mxu0 %v1372
        %v1547 = vpop.f32.mrf.mxu0
        %v1548 = vadd.f32 0.0, %v1547
        %v1549 = vpop.f32.mrf.mxu0
        %1550 = vdwg.mxu0
        %v1551 = vadd.f32 %v1373, %v1473
        %v1552 = vadd.f32 %v1374, %v1478
        %v1553 = vadd.f32 %v1375, %v1483
        %v1554 = vadd.f32 %v1376, %v1488
        %v1555 = vadd.f32 %v1377, %v1493
        %v1556 = vadd.f32 %v1378, %v1498
        %v1557 = vadd.f32 %v1379, %v1503
        %v1558 = vadd.f32 %v1380, %v1508
        %v1559 = vadd.f32 %v1381, %v1513
        %v1560 = vadd.f32 %v1382, %v1518
        %v1561 = vadd.f32 %v1383, %v1523
        %v1562 = vadd.f32 %v1384, %v1528
        %v1563 = vadd.f32 %v1385, %v1533
        %v1564 = vadd.f32 %v1386, %v1538
        %v1565 = vadd.f32 %v1387, %v1543
        %v1566 = vadd.f32 %v1388, %v1548
        %1567 = vst [vmem:[#allocation2] sm:$0xff] %v1551
        %1568 = vst [vmem:[#allocation2 + $0x8] sm:$0xff] %v1552
        %1569 = vst [vmem:[#allocation2 + $0x10] sm:$0xff] %v1553
        %1570 = vst [vmem:[#allocation2 + $0x18] sm:$0xff] %v1554
        %1571 = vst [vmem:[#allocation2 + $0x20] sm:$0xff] %v1555
        %1572 = vst [vmem:[#allocation2 + $0x28] sm:$0xff] %v1556
        %1573 = vst [vmem:[#allocation2 + $0x30] sm:$0xff] %v1557
        %1574 = vst [vmem:[#allocation2 + $0x38] sm:$0xff] %v1558
        %1575 = vst [vmem:[#allocation2 + $0x40] sm:$0xff] %v1559
        %1576 = vst [vmem:[#allocation2 + $0x48] sm:$0xff] %v1560
        %1577 = vst [vmem:[#allocation2 + $0x50] sm:$0xff] %v1561
        %1578 = vst [vmem:[#allocation2 + $0x58] sm:$0xff] %v1562
        %1579 = vst [vmem:[#allocation2 + $0x60] sm:$0xff] %v1563
        %1580 = vst [vmem:[#allocation2 + $0x68] sm:$0xff] %v1564
        %1581 = vst [vmem:[#allocation2 + $0x70] sm:$0xff] %v1565
        %1582 = vst [vmem:[#allocation2 + $0x78] sm:$0xff] %v1566
        %s1583 = scalar_lea.vmem %s209, 48
        %v1584 = vld [vmem:[%s1583] sm:$0xff]
        %v1585 = vld [vmem:[%s1583 + $0x8] sm:$0xff]
        %v1586 = vld [vmem:[%s1583 + $0x18] sm:$0xff]
        %v1587 = vld [vmem:[%s1583 + $0x20] sm:$0xff]
        %v1588 = vld [vmem:[%s1583 + $0x30] sm:$0xff]
        %v1589 = vld [vmem:[%s1583 + $0x38] sm:$0xff]
        %v1590 = vld [vmem:[%s1583 + $0x48] sm:$0xff]
        %v1591 = vld [vmem:[%s1583 + $0x50] sm:$0xff]
        %v1592 = vld [vmem:[%s1583 + $0x60] sm:$0xff]
        %v1593 = vld [vmem:[%s1583 + $0x68] sm:$0xff]
        %v1594 = vld [vmem:[%s1583 + $0x78] sm:$0xff]
        %v1595 = vld [vmem:[%s1583 + $0x80] sm:$0xff]
        %v1596 = vld [vmem:[%s1583 + $0x90] sm:$0xff]
        %v1597 = vld [vmem:[%s1583 + $0x98] sm:$0xff]
        %v1598 = vld [vmem:[%s1583 + $0xa8] sm:$0xff]
        %v1599 = vld [vmem:[%s1583 + $0xb0] sm:$0xff]
        %v1600 = vld [vmem:[#allocation2] sm:$0xff]
        %v1601 = vld [vmem:[#allocation2 + $0x8] sm:$0xff]
        %v1602 = vld [vmem:[#allocation2 + $0x10] sm:$0xff]
        %v1603 = vld [vmem:[#allocation2 + $0x18] sm:$0xff]
        %v1604 = vld [vmem:[#allocation2 + $0x20] sm:$0xff]
        %v1605 = vld [vmem:[#allocation2 + $0x28] sm:$0xff]
        %v1606 = vld [vmem:[#allocation2 + $0x30] sm:$0xff]
        %v1607 = vld [vmem:[#allocation2 + $0x38] sm:$0xff]
        %v1608 = vld [vmem:[#allocation2 + $0x40] sm:$0xff]
        %v1609 = vld [vmem:[#allocation2 + $0x48] sm:$0xff]
        %v1610 = vld [vmem:[#allocation2 + $0x50] sm:$0xff]
        %v1611 = vld [vmem:[#allocation2 + $0x58] sm:$0xff]
        %v1612 = vld [vmem:[#allocation2 + $0x60] sm:$0xff]
        %v1613 = vld [vmem:[#allocation2 + $0x68] sm:$0xff]
        %v1614 = vld [vmem:[#allocation2 + $0x70] sm:$0xff]
        %v1615 = vld [vmem:[#allocation2 + $0x78] sm:$0xff]
        %s1616 = scalar_lea.vmem %s1, 768
        %v1617 = vld [vmem:[%s1616] sm:$0xff]
        %v1618 = vld [vmem:[%s1616 + $0x8] sm:$0xff]
        %v1619 = vld [vmem:[%s1616 + $0x10] sm:$0xff]
        %v1620 = vld [vmem:[%s1616 + $0x18] sm:$0xff]
        %v1621 = vld [vmem:[%s1616 + $0x20] sm:$0xff]
        %v1622 = vld [vmem:[%s1616 + $0x28] sm:$0xff]
        %v1623 = vld [vmem:[%s1616 + $0x30] sm:$0xff]
        %v1624 = vld [vmem:[%s1616 + $0x38] sm:$0xff]
        %v1625 = vld [vmem:[%s1616 + $0x40] sm:$0xff]
        %v1626 = vld [vmem:[%s1616 + $0x48] sm:$0xff]
        %v1627 = vld [vmem:[%s1616 + $0x50] sm:$0xff]
        %v1628 = vld [vmem:[%s1616 + $0x58] sm:$0xff]
        %v1629 = vld [vmem:[%s1616 + $0x60] sm:$0xff]
        %v1630 = vld [vmem:[%s1616 + $0x68] sm:$0xff]
        %v1631 = vld [vmem:[%s1616 + $0x70] sm:$0xff]
        %v1632 = vld [vmem:[%s1616 + $0x78] sm:$0xff]
        %1633 = vmatprep.subr.mxu0 0.0
        %1634 = vmatpush1.msra.mxu0 %v1632
        %1635 = vmatprep.subr.mxu0 0.0
        %1636 = vmatpush1.msra.mxu0 %v1631
        %1637 = vmatprep.subr.mxu0 0.0
        %1638 = vmatpush1.msra.mxu0 %v1630
        %1639 = vmatprep.subr.mxu0 0.0
        %1640 = vmatpush1.msra.mxu0 %v1629
        %1641 = vmatprep.subr.mxu0 0.0
        %1642 = vmatpush1.msra.mxu0 %v1628
        %1643 = vmatprep.subr.mxu0 0.0
        %1644 = vmatpush1.msra.mxu0 %v1627
        %1645 = vmatprep.subr.mxu0 0.0
        %1646 = vmatpush1.msra.mxu0 %v1626
        %1647 = vmatprep.subr.mxu0 0.0
        %1648 = vmatpush1.msra.mxu0 %v1625
        %1649 = vmatprep.subr.mxu0 0.0
        %1650 = vmatpush1.msra.mxu0 %v1624
        %1651 = vmatprep.subr.mxu0 0.0
        %1652 = vmatpush1.msra.mxu0 %v1623
        %1653 = vmatprep.subr.mxu0 0.0
        %1654 = vmatpush1.msra.mxu0 %v1622
        %1655 = vmatprep.subr.mxu0 0.0
        %1656 = vmatpush1.msra.mxu0 %v1621
        %1657 = vmatprep.subr.mxu0 0.0
        %1658 = vmatpush1.msra.mxu0 %v1620
        %1659 = vmatprep.subr.mxu0 0.0
        %1660 = vmatpush1.msra.mxu0 %v1619
        %1661 = vmatprep.subr.mxu0 0.0
        %1662 = vmatpush1.msra.mxu0 %v1618
        %1663 = vmatprep.subr.mxu0 0.0
        %1664 = vmatpush1.msra.mxu0 %v1617
        %1665 = vmatprep.subr.mxu0 0.0
        %1666 = vmatpush2.msra.mxu0 0.0
        %1667 = vmatprep.subr.mxu0 0.0
        %1668 = vmatpush2.msra.mxu0 0.0
        %1669 = vmatprep.subr.mxu0 0.0
        %1670 = vmatpush2.msra.mxu0 0.0
        %1671 = vmatprep.subr.mxu0 0.0
        %1672 = vmatpush2.msra.mxu0 0.0
        %1673 = vmatprep.subr.mxu0 0.0
        %1674 = vmatpush2.msra.mxu0 0.0
        %1675 = vmatprep.subr.mxu0 0.0
        %1676 = vmatpush2.msra.mxu0 0.0
        %1677 = vmatprep.subr.mxu0 0.0
        %1678 = vmatpush2.msra.mxu0 0.0
        %1679 = vmatprep.subr.mxu0 0.0
        %1680 = vmatpush2.msra.mxu0 0.0
        %1681 = vmatprep.subr.mxu0 0.0
        %1682 = vmatpush2.msra.mxu0 0.0
        %1683 = vmatprep.subr.mxu0 0.0
        %1684 = vmatpush2.msra.mxu0 0.0
        %1685 = vmatprep.subr.mxu0 0.0
        %1686 = vmatpush2.msra.mxu0 0.0
        %1687 = vmatprep.subr.mxu0 0.0
        %1688 = vmatpush2.msra.mxu0 0.0
        %1689 = vmatprep.subr.mxu0 0.0
        %1690 = vmatpush2.msra.mxu0 0.0
        %1691 = vmatprep.subr.mxu0 0.0
        %1692 = vmatpush2.msra.mxu0 0.0
        %1693 = vmatprep.subr.mxu0 0.0
        %1694 = vmatpush2.msra.mxu0 0.0
        %1695 = vmatprep.subr.mxu0 0.0
        %1696 = vmatpush2.msra.mxu0 0.0
        %1697 = vmatprep.mubr.f32.mxu0 0.0
        %1698 = vmatmul.mubr.f32.gmra.mxu0 %v1584
        %v1699 = vpop.f32.mrf.mxu0
        %v1700 = vadd.f32 0.0, %v1699
        %v1701 = vpop.f32.mrf.mxu0
        %1702 = vmatprep.mubr.f32.mxu0 0.0
        %1703 = vmatmul.mubr.f32.gmra.mxu0 %v1585
        %v1704 = vpop.f32.mrf.mxu0
        %v1705 = vadd.f32 0.0, %v1704
        %v1706 = vpop.f32.mrf.mxu0
        %1707 = vmatprep.mubr.f32.mxu0 0.0
        %1708 = vmatmul.mubr.f32.gmra.mxu0 %v1586
        %v1709 = vpop.f32.mrf.mxu0
        %v1710 = vadd.f32 0.0, %v1709
        %v1711 = vpop.f32.mrf.mxu0
        %1712 = vmatprep.mubr.f32.mxu0 0.0
        %1713 = vmatmul.mubr.f32.gmra.mxu0 %v1587
        %v1714 = vpop.f32.mrf.mxu0
        %v1715 = vadd.f32 0.0, %v1714
        %v1716 = vpop.f32.mrf.mxu0
        %1717 = vmatprep.mubr.f32.mxu0 0.0
        %1718 = vmatmul.mubr.f32.gmra.mxu0 %v1588
        %v1719 = vpop.f32.mrf.mxu0
        %v1720 = vadd.f32 0.0, %v1719
        %v1721 = vpop.f32.mrf.mxu0
        %1722 = vmatprep.mubr.f32.mxu0 0.0
        %1723 = vmatmul.mubr.f32.gmra.mxu0 %v1589
        %v1724 = vpop.f32.mrf.mxu0
        %v1725 = vadd.f32 0.0, %v1724
        %v1726 = vpop.f32.mrf.mxu0
        %1727 = vmatprep.mubr.f32.mxu0 0.0
        %1728 = vmatmul.mubr.f32.gmra.mxu0 %v1590
        %v1729 = vpop.f32.mrf.mxu0
        %v1730 = vadd.f32 0.0, %v1729
        %v1731 = vpop.f32.mrf.mxu0
        %1732 = vmatprep.mubr.f32.mxu0 0.0
        %1733 = vmatmul.mubr.f32.gmra.mxu0 %v1591
        %v1734 = vpop.f32.mrf.mxu0
        %v1735 = vadd.f32 0.0, %v1734
        %v1736 = vpop.f32.mrf.mxu0
        %1737 = vmatprep.mubr.f32.mxu0 0.0
        %1738 = vmatmul.mubr.f32.gmra.mxu0 %v1592
        %v1739 = vpop.f32.mrf.mxu0
        %v1740 = vadd.f32 0.0, %v1739
        %v1741 = vpop.f32.mrf.mxu0
        %1742 = vmatprep.mubr.f32.mxu0 0.0
        %1743 = vmatmul.mubr.f32.gmra.mxu0 %v1593
        %v1744 = vpop.f32.mrf.mxu0
        %v1745 = vadd.f32 0.0, %v1744
        %v1746 = vpop.f32.mrf.mxu0
        %1747 = vmatprep.mubr.f32.mxu0 0.0
        %1748 = vmatmul.mubr.f32.gmra.mxu0 %v1594
        %v1749 = vpop.f32.mrf.mxu0
        %v1750 = vadd.f32 0.0, %v1749
        %v1751 = vpop.f32.mrf.mxu0
        %1752 = vmatprep.mubr.f32.mxu0 0.0
        %1753 = vmatmul.mubr.f32.gmra.mxu0 %v1595
        %v1754 = vpop.f32.mrf.mxu0
        %v1755 = vadd.f32 0.0, %v1754
        %v1756 = vpop.f32.mrf.mxu0
        %1757 = vmatprep.mubr.f32.mxu0 0.0
        %1758 = vmatmul.mubr.f32.gmra.mxu0 %v1596
        %v1759 = vpop.f32.mrf.mxu0
        %v1760 = vadd.f32 0.0, %v1759
        %v1761 = vpop.f32.mrf.mxu0
        %1762 = vmatprep.mubr.f32.mxu0 0.0
        %1763 = vmatmul.mubr.f32.gmra.mxu0 %v1597
        %v1764 = vpop.f32.mrf.mxu0
        %v1765 = vadd.f32 0.0, %v1764
        %v1766 = vpop.f32.mrf.mxu0
        %1767 = vmatprep.mubr.f32.mxu0 0.0
        %1768 = vmatmul.mubr.f32.gmra.mxu0 %v1598
        %v1769 = vpop.f32.mrf.mxu0
        %v1770 = vadd.f32 0.0, %v1769
        %v1771 = vpop.f32.mrf.mxu0
        %1772 = vmatprep.mubr.f32.mxu0 0.0
        %1773 = vmatmul.mubr.f32.gmra.mxu0 %v1599
        %v1774 = vpop.f32.mrf.mxu0
        %v1775 = vadd.f32 0.0, %v1774
        %v1776 = vpop.f32.mrf.mxu0
        %1777 = vdwg.mxu0
        %v1778 = vadd.f32 %v1600, %v1700
        %v1779 = vadd.f32 %v1601, %v1705
        %v1780 = vadd.f32 %v1602, %v1710
        %v1781 = vadd.f32 %v1603, %v1715
        %v1782 = vadd.f32 %v1604, %v1720
        %v1783 = vadd.f32 %v1605, %v1725
        %v1784 = vadd.f32 %v1606, %v1730
        %v1785 = vadd.f32 %v1607, %v1735
        %v1786 = vadd.f32 %v1608, %v1740
        %v1787 = vadd.f32 %v1609, %v1745
        %v1788 = vadd.f32 %v1610, %v1750
        %v1789 = vadd.f32 %v1611, %v1755
        %v1790 = vadd.f32 %v1612, %v1760
        %v1791 = vadd.f32 %v1613, %v1765
        %v1792 = vadd.f32 %v1614, %v1770
        %v1793 = vadd.f32 %v1615, %v1775
        %1794 = vst [vmem:[#allocation2] sm:$0xff] %v1778
        %1795 = vst [vmem:[#allocation2 + $0x8] sm:$0xff] %v1779
        %1796 = vst [vmem:[#allocation2 + $0x10] sm:$0xff] %v1780
        %1797 = vst [vmem:[#allocation2 + $0x18] sm:$0xff] %v1781
        %1798 = vst [vmem:[#allocation2 + $0x20] sm:$0xff] %v1782
        %1799 = vst [vmem:[#allocation2 + $0x28] sm:$0xff] %v1783
        %1800 = vst [vmem:[#allocation2 + $0x30] sm:$0xff] %v1784
        %1801 = vst [vmem:[#allocation2 + $0x38] sm:$0xff] %v1785
        %1802 = vst [vmem:[#allocation2 + $0x40] sm:$0xff] %v1786
        %1803 = vst [vmem:[#allocation2 + $0x48] sm:$0xff] %v1787
        %1804 = vst [vmem:[#allocation2 + $0x50] sm:$0xff] %v1788
        %1805 = vst [vmem:[#allocation2 + $0x58] sm:$0xff] %v1789
        %1806 = vst [vmem:[#allocation2 + $0x60] sm:$0xff] %v1790
        %1807 = vst [vmem:[#allocation2 + $0x68] sm:$0xff] %v1791
        %1808 = vst [vmem:[#allocation2 + $0x70] sm:$0xff] %v1792
        %1809 = vst [vmem:[#allocation2 + $0x78] sm:$0xff] %v1793
        %v1810 = vld [vmem:[%s1583 + $0x1] sm:$0xff]
        %v1811 = vld [vmem:[%s1583 + $0x9] sm:$0xff]
        %v1812 = vld [vmem:[%s1583 + $0x19] sm:$0xff]
        %v1813 = vld [vmem:[%s1583 + $0x21] sm:$0xff]
        %v1814 = vld [vmem:[%s1583 + $0x31] sm:$0xff]
        %v1815 = vld [vmem:[%s1583 + $0x39] sm:$0xff]
        %v1816 = vld [vmem:[%s1583 + $0x49] sm:$0xff]
        %v1817 = vld [vmem:[%s1583 + $0x51] sm:$0xff]
        %v1818 = vld [vmem:[%s1583 + $0x61] sm:$0xff]
        %v1819 = vld [vmem:[%s1583 + $0x69] sm:$0xff]
        %v1820 = vld [vmem:[%s1583 + $0x79] sm:$0xff]
        %v1821 = vld [vmem:[%s1583 + $0x81] sm:$0xff]
        %v1822 = vld [vmem:[%s1583 + $0x91] sm:$0xff]
        %v1823 = vld [vmem:[%s1583 + $0x99] sm:$0xff]
        %v1824 = vld [vmem:[%s1583 + $0xa9] sm:$0xff]
        %v1825 = vld [vmem:[%s1583 + $0xb1] sm:$0xff]
        %v1826 = vld [vmem:[#allocation2] sm:$0xff]
        %v1827 = vld [vmem:[#allocation2 + $0x8] sm:$0xff]
        %v1828 = vld [vmem:[#allocation2 + $0x10] sm:$0xff]
        %v1829 = vld [vmem:[#allocation2 + $0x18] sm:$0xff]
        %v1830 = vld [vmem:[#allocation2 + $0x20] sm:$0xff]
        %v1831 = vld [vmem:[#allocation2 + $0x28] sm:$0xff]
        %v1832 = vld [vmem:[#allocation2 + $0x30] sm:$0xff]
        %v1833 = vld [vmem:[#allocation2 + $0x38] sm:$0xff]
        %v1834 = vld [vmem:[#allocation2 + $0x40] sm:$0xff]
        %v1835 = vld [vmem:[#allocation2 + $0x48] sm:$0xff]
        %v1836 = vld [vmem:[#allocation2 + $0x50] sm:$0xff]
        %v1837 = vld [vmem:[#allocation2 + $0x58] sm:$0xff]
        %v1838 = vld [vmem:[#allocation2 + $0x60] sm:$0xff]
        %v1839 = vld [vmem:[#allocation2 + $0x68] sm:$0xff]
        %v1840 = vld [vmem:[#allocation2 + $0x70] sm:$0xff]
        %v1841 = vld [vmem:[#allocation2 + $0x78] sm:$0xff]
        %s1842 = scalar_lea.vmem %s1, 896
        %v1843 = vld [vmem:[%s1842] sm:$0xff]
        %v1844 = vld [vmem:[%s1842 + $0x8] sm:$0xff]
        %v1845 = vld [vmem:[%s1842 + $0x10] sm:$0xff]
        %v1846 = vld [vmem:[%s1842 + $0x18] sm:$0xff]
        %v1847 = vld [vmem:[%s1842 + $0x20] sm:$0xff]
        %v1848 = vld [vmem:[%s1842 + $0x28] sm:$0xff]
        %v1849 = vld [vmem:[%s1842 + $0x30] sm:$0xff]
        %v1850 = vld [vmem:[%s1842 + $0x38] sm:$0xff]
        %v1851 = vld [vmem:[%s1842 + $0x40] sm:$0xff]
        %v1852 = vld [vmem:[%s1842 + $0x48] sm:$0xff]
        %v1853 = vld [vmem:[%s1842 + $0x50] sm:$0xff]
        %v1854 = vld [vmem:[%s1842 + $0x58] sm:$0xff]
        %v1855 = vld [vmem:[%s1842 + $0x60] sm:$0xff]
        %v1856 = vld [vmem:[%s1842 + $0x68] sm:$0xff]
        %v1857 = vld [vmem:[%s1842 + $0x70] sm:$0xff]
        %v1858 = vld [vmem:[%s1842 + $0x78] sm:$0xff]
        %1859 = vmatprep.subr.mxu0 0.0
        %1860 = vmatpush1.msra.mxu0 %v1858
        %1861 = vmatprep.subr.mxu0 0.0
        %1862 = vmatpush1.msra.mxu0 %v1857
        %1863 = vmatprep.subr.mxu0 0.0
        %1864 = vmatpush1.msra.mxu0 %v1856
        %1865 = vmatprep.subr.mxu0 0.0
        %1866 = vmatpush1.msra.mxu0 %v1855
        %1867 = vmatprep.subr.mxu0 0.0
        %1868 = vmatpush1.msra.mxu0 %v1854
        %1869 = vmatprep.subr.mxu0 0.0
        %1870 = vmatpush1.msra.mxu0 %v1853
        %1871 = vmatprep.subr.mxu0 0.0
        %1872 = vmatpush1.msra.mxu0 %v1852
        %1873 = vmatprep.subr.mxu0 0.0
        %1874 = vmatpush1.msra.mxu0 %v1851
        %1875 = vmatprep.subr.mxu0 0.0
        %1876 = vmatpush1.msra.mxu0 %v1850
        %1877 = vmatprep.subr.mxu0 0.0
        %1878 = vmatpush1.msra.mxu0 %v1849
        %1879 = vmatprep.subr.mxu0 0.0
        %1880 = vmatpush1.msra.mxu0 %v1848
        %1881 = vmatprep.subr.mxu0 0.0
        %1882 = vmatpush1.msra.mxu0 %v1847
        %1883 = vmatprep.subr.mxu0 0.0
        %1884 = vmatpush1.msra.mxu0 %v1846
        %1885 = vmatprep.subr.mxu0 0.0
        %1886 = vmatpush1.msra.mxu0 %v1845
        %1887 = vmatprep.subr.mxu0 0.0
        %1888 = vmatpush1.msra.mxu0 %v1844
        %1889 = vmatprep.subr.mxu0 0.0
        %1890 = vmatpush1.msra.mxu0 %v1843
        %1891 = vmatprep.subr.mxu0 0.0
        %1892 = vmatpush2.msra.mxu0 0.0
        %1893 = vmatprep.subr.mxu0 0.0
        %1894 = vmatpush2.msra.mxu0 0.0
        %1895 = vmatprep.subr.mxu0 0.0
        %1896 = vmatpush2.msra.mxu0 0.0
        %1897 = vmatprep.subr.mxu0 0.0
        %1898 = vmatpush2.msra.mxu0 0.0
        %1899 = vmatprep.subr.mxu0 0.0
        %1900 = vmatpush2.msra.mxu0 0.0
        %1901 = vmatprep.subr.mxu0 0.0
        %1902 = vmatpush2.msra.mxu0 0.0
        %1903 = vmatprep.subr.mxu0 0.0
        %1904 = vmatpush2.msra.mxu0 0.0
        %1905 = vmatprep.subr.mxu0 0.0
        %1906 = vmatpush2.msra.mxu0 0.0
        %1907 = vmatprep.subr.mxu0 0.0
        %1908 = vmatpush2.msra.mxu0 0.0
        %1909 = vmatprep.subr.mxu0 0.0
        %1910 = vmatpush2.msra.mxu0 0.0
        %1911 = vmatprep.subr.mxu0 0.0
        %1912 = vmatpush2.msra.mxu0 0.0
        %1913 = vmatprep.subr.mxu0 0.0
        %1914 = vmatpush2.msra.mxu0 0.0
        %1915 = vmatprep.subr.mxu0 0.0
        %1916 = vmatpush2.msra.mxu0 0.0
        %1917 = vmatprep.subr.mxu0 0.0
        %1918 = vmatpush2.msra.mxu0 0.0
        %1919 = vmatprep.subr.mxu0 0.0
        %1920 = vmatpush2.msra.mxu0 0.0
        %1921 = vmatprep.subr.mxu0 0.0
        %1922 = vmatpush2.msra.mxu0 0.0
        %1923 = vmatprep.mubr.f32.mxu0 0.0
        %1924 = vmatmul.mubr.f32.gmra.mxu0 %v1810
        %v1925 = vpop.f32.mrf.mxu0
        %v1926 = vadd.f32 0.0, %v1925
        %v1927 = vpop.f32.mrf.mxu0
        %1928 = vmatprep.mubr.f32.mxu0 0.0
        %1929 = vmatmul.mubr.f32.gmra.mxu0 %v1811
        %v1930 = vpop.f32.mrf.mxu0
        %v1931 = vadd.f32 0.0, %v1930
        %v1932 = vpop.f32.mrf.mxu0
        %1933 = vmatprep.mubr.f32.mxu0 0.0
        %1934 = vmatmul.mubr.f32.gmra.mxu0 %v1812
        %v1935 = vpop.f32.mrf.mxu0
        %v1936 = vadd.f32 0.0, %v1935
        %v1937 = vpop.f32.mrf.mxu0
        %1938 = vmatprep.mubr.f32.mxu0 0.0
        %1939 = vmatmul.mubr.f32.gmra.mxu0 %v1813
        %v1940 = vpop.f32.mrf.mxu0
        %v1941 = vadd.f32 0.0, %v1940
        %v1942 = vpop.f32.mrf.mxu0
        %1943 = vmatprep.mubr.f32.mxu0 0.0
        %1944 = vmatmul.mubr.f32.gmra.mxu0 %v1814
        %v1945 = vpop.f32.mrf.mxu0
        %v1946 = vadd.f32 0.0, %v1945
        %v1947 = vpop.f32.mrf.mxu0
        %1948 = vmatprep.mubr.f32.mxu0 0.0
        %1949 = vmatmul.mubr.f32.gmra.mxu0 %v1815
        %v1950 = vpop.f32.mrf.mxu0
        %v1951 = vadd.f32 0.0, %v1950
        %v1952 = vpop.f32.mrf.mxu0
        %1953 = vmatprep.mubr.f32.mxu0 0.0
        %1954 = vmatmul.mubr.f32.gmra.mxu0 %v1816
        %v1955 = vpop.f32.mrf.mxu0
        %v1956 = vadd.f32 0.0, %v1955
        %v1957 = vpop.f32.mrf.mxu0
        %1958 = vmatprep.mubr.f32.mxu0 0.0
        %1959 = vmatmul.mubr.f32.gmra.mxu0 %v1817
        %v1960 = vpop.f32.mrf.mxu0
        %v1961 = vadd.f32 0.0, %v1960
        %v1962 = vpop.f32.mrf.mxu0
        %1963 = vmatprep.mubr.f32.mxu0 0.0
        %1964 = vmatmul.mubr.f32.gmra.mxu0 %v1818
        %v1965 = vpop.f32.mrf.mxu0
        %v1966 = vadd.f32 0.0, %v1965
        %v1967 = vpop.f32.mrf.mxu0
        %1968 = vmatprep.mubr.f32.mxu0 0.0
        %1969 = vmatmul.mubr.f32.gmra.mxu0 %v1819
        %v1970 = vpop.f32.mrf.mxu0
        %v1971 = vadd.f32 0.0, %v1970
        %v1972 = vpop.f32.mrf.mxu0
        %1973 = vmatprep.mubr.f32.mxu0 0.0
        %1974 = vmatmul.mubr.f32.gmra.mxu0 %v1820
        %v1975 = vpop.f32.mrf.mxu0
        %v1976 = vadd.f32 0.0, %v1975
        %v1977 = vpop.f32.mrf.mxu0
        %1978 = vmatprep.mubr.f32.mxu0 0.0
        %1979 = vmatmul.mubr.f32.gmra.mxu0 %v1821
        %v1980 = vpop.f32.mrf.mxu0
        %v1981 = vadd.f32 0.0, %v1980
        %v1982 = vpop.f32.mrf.mxu0
        %1983 = vmatprep.mubr.f32.mxu0 0.0
        %1984 = vmatmul.mubr.f32.gmra.mxu0 %v1822
        %v1985 = vpop.f32.mrf.mxu0
        %v1986 = vadd.f32 0.0, %v1985
        %v1987 = vpop.f32.mrf.mxu0
        %1988 = vmatprep.mubr.f32.mxu0 0.0
        %1989 = vmatmul.mubr.f32.gmra.mxu0 %v1823
        %v1990 = vpop.f32.mrf.mxu0
        %v1991 = vadd.f32 0.0, %v1990
        %v1992 = vpop.f32.mrf.mxu0
        %1993 = vmatprep.mubr.f32.mxu0 0.0
        %1994 = vmatmul.mubr.f32.gmra.mxu0 %v1824
        %v1995 = vpop.f32.mrf.mxu0
        %v1996 = vadd.f32 0.0, %v1995
        %v1997 = vpop.f32.mrf.mxu0
        %1998 = vmatprep.mubr.f32.mxu0 0.0
        %1999 = vmatmul.mubr.f32.gmra.mxu0 %v1825
        %v2000 = vpop.f32.mrf.mxu0
        %v2001 = vadd.f32 0.0, %v2000
        %v2002 = vpop.f32.mrf.mxu0
        %2003 = vdwg.mxu0
        %v2004 = vadd.f32 %v1826, %v1926
        %v2005 = vadd.f32 %v1827, %v1931
        %v2006 = vadd.f32 %v1828, %v1936
        %v2007 = vadd.f32 %v1829, %v1941
        %v2008 = vadd.f32 %v1830, %v1946
        %v2009 = vadd.f32 %v1831, %v1951
        %v2010 = vadd.f32 %v1832, %v1956
        %v2011 = vadd.f32 %v1833, %v1961
        %v2012 = vadd.f32 %v1834, %v1966
        %v2013 = vadd.f32 %v1835, %v1971
        %v2014 = vadd.f32 %v1836, %v1976
        %v2015 = vadd.f32 %v1837, %v1981
        %v2016 = vadd.f32 %v1838, %v1986
        %v2017 = vadd.f32 %v1839, %v1991
        %v2018 = vadd.f32 %v1840, %v1996
        %v2019 = vadd.f32 %v1841, %v2001
        %2020 = vst [vmem:[#allocation2] sm:$0xff] %v2004
        %2021 = vst [vmem:[#allocation2 + $0x8] sm:$0xff] %v2005
        %2022 = vst [vmem:[#allocation2 + $0x10] sm:$0xff] %v2006
        %2023 = vst [vmem:[#allocation2 + $0x18] sm:$0xff] %v2007
        %2024 = vst [vmem:[#allocation2 + $0x20] sm:$0xff] %v2008
        %2025 = vst [vmem:[#allocation2 + $0x28] sm:$0xff] %v2009
        %2026 = vst [vmem:[#allocation2 + $0x30] sm:$0xff] %v2010
        %2027 = vst [vmem:[#allocation2 + $0x38] sm:$0xff] %v2011
        %2028 = vst [vmem:[#allocation2 + $0x40] sm:$0xff] %v2012
        %2029 = vst [vmem:[#allocation2 + $0x48] sm:$0xff] %v2013
        %2030 = vst [vmem:[#allocation2 + $0x50] sm:$0xff] %v2014
        %2031 = vst [vmem:[#allocation2 + $0x58] sm:$0xff] %v2015
        %2032 = vst [vmem:[#allocation2 + $0x60] sm:$0xff] %v2016
        %2033 = vst [vmem:[#allocation2 + $0x68] sm:$0xff] %v2017
        %2034 = vst [vmem:[#allocation2 + $0x70] sm:$0xff] %v2018
        %2035 = vst [vmem:[#allocation2 + $0x78] sm:$0xff] %v2019
        %v2036 = vld [vmem:[%s1583 + $0x2] sm:$0xff]
        %v2037 = vld [vmem:[%s1583 + $0xa] sm:$0xff]
        %v2038 = vld [vmem:[%s1583 + $0x1a] sm:$0xff]
        %v2039 = vld [vmem:[%s1583 + $0x22] sm:$0xff]
        %v2040 = vld [vmem:[%s1583 + $0x32] sm:$0xff]
        %v2041 = vld [vmem:[%s1583 + $0x3a] sm:$0xff]
        %v2042 = vld [vmem:[%s1583 + $0x4a] sm:$0xff]
        %v2043 = vld [vmem:[%s1583 + $0x52] sm:$0xff]
        %v2044 = vld [vmem:[%s1583 + $0x62] sm:$0xff]
        %v2045 = vld [vmem:[%s1583 + $0x6a] sm:$0xff]
        %v2046 = vld [vmem:[%s1583 + $0x7a] sm:$0xff]
        %v2047 = vld [vmem:[%s1583 + $0x82] sm:$0xff]
        %v2048 = vld [vmem:[%s1583 + $0x92] sm:$0xff]
        %v2049 = vld [vmem:[%s1583 + $0x9a] sm:$0xff]
        %v2050 = vld [vmem:[%s1583 + $0xaa] sm:$0xff]
        %v2051 = vld [vmem:[%s1583 + $0xb2] sm:$0xff]
        %v2052 = vld [vmem:[#allocation2] sm:$0xff]
        %v2053 = vld [vmem:[#allocation2 + $0x8] sm:$0xff]
        %v2054 = vld [vmem:[#allocation2 + $0x10] sm:$0xff]
        %v2055 = vld [vmem:[#allocation2 + $0x18] sm:$0xff]
        %v2056 = vld [vmem:[#allocation2 + $0x20] sm:$0xff]
        %v2057 = vld [vmem:[#allocation2 + $0x28] sm:$0xff]
        %v2058 = vld [vmem:[#allocation2 + $0x30] sm:$0xff]
        %v2059 = vld [vmem:[#allocation2 + $0x38] sm:$0xff]
        %v2060 = vld [vmem:[#allocation2 + $0x40] sm:$0xff]
        %v2061 = vld [vmem:[#allocation2 + $0x48] sm:$0xff]
        %v2062 = vld [vmem:[#allocation2 + $0x50] sm:$0xff]
        %v2063 = vld [vmem:[#allocation2 + $0x58] sm:$0xff]
        %v2064 = vld [vmem:[#allocation2 + $0x60] sm:$0xff]
        %v2065 = vld [vmem:[#allocation2 + $0x68] sm:$0xff]
        %v2066 = vld [vmem:[#allocation2 + $0x70] sm:$0xff]
        %v2067 = vld [vmem:[#allocation2 + $0x78] sm:$0xff]
        %s2068 = scalar_lea.vmem %s1, 1024
        %v2069 = vld [vmem:[%s2068] sm:$0xff]
        %v2070 = vld [vmem:[%s2068 + $0x8] sm:$0xff]
        %v2071 = vld [vmem:[%s2068 + $0x10] sm:$0xff]
        %v2072 = vld [vmem:[%s2068 + $0x18] sm:$0xff]
        %v2073 = vld [vmem:[%s2068 + $0x20] sm:$0xff]
        %v2074 = vld [vmem:[%s2068 + $0x28] sm:$0xff]
        %v2075 = vld [vmem:[%s2068 + $0x30] sm:$0xff]
        %v2076 = vld [vmem:[%s2068 + $0x38] sm:$0xff]
        %v2077 = vld [vmem:[%s2068 + $0x40] sm:$0xff]
        %v2078 = vld [vmem:[%s2068 + $0x48] sm:$0xff]
        %v2079 = vld [vmem:[%s2068 + $0x50] sm:$0xff]
        %v2080 = vld [vmem:[%s2068 + $0x58] sm:$0xff]
        %v2081 = vld [vmem:[%s2068 + $0x60] sm:$0xff]
        %v2082 = vld [vmem:[%s2068 + $0x68] sm:$0xff]
        %v2083 = vld [vmem:[%s2068 + $0x70] sm:$0xff]
        %v2084 = vld [vmem:[%s2068 + $0x78] sm:$0xff]
        %2085 = vmatprep.subr.mxu0 0.0
        %2086 = vmatpush1.msra.mxu0 %v2084
        %2087 = vmatprep.subr.mxu0 0.0
        %2088 = vmatpush1.msra.mxu0 %v2083
        %2089 = vmatprep.subr.mxu0 0.0
        %2090 = vmatpush1.msra.mxu0 %v2082
        %2091 = vmatprep.subr.mxu0 0.0
        %2092 = vmatpush1.msra.mxu0 %v2081
        %2093 = vmatprep.subr.mxu0 0.0
        %2094 = vmatpush1.msra.mxu0 %v2080
        %2095 = vmatprep.subr.mxu0 0.0
        %2096 = vmatpush1.msra.mxu0 %v2079
        %2097 = vmatprep.subr.mxu0 0.0
        %2098 = vmatpush1.msra.mxu0 %v2078
        %2099 = vmatprep.subr.mxu0 0.0
        %2100 = vmatpush1.msra.mxu0 %v2077
        %2101 = vmatprep.subr.mxu0 0.0
        %2102 = vmatpush1.msra.mxu0 %v2076
        %2103 = vmatprep.subr.mxu0 0.0
        %2104 = vmatpush1.msra.mxu0 %v2075
        %2105 = vmatprep.subr.mxu0 0.0
        %2106 = vmatpush1.msra.mxu0 %v2074
        %2107 = vmatprep.subr.mxu0 0.0
        %2108 = vmatpush1.msra.mxu0 %v2073
        %2109 = vmatprep.subr.mxu0 0.0
        %2110 = vmatpush1.msra.mxu0 %v2072
        %2111 = vmatprep.subr.mxu0 0.0
        %2112 = vmatpush1.msra.mxu0 %v2071
        %2113 = vmatprep.subr.mxu0 0.0
        %2114 = vmatpush1.msra.mxu0 %v2070
        %2115 = vmatprep.subr.mxu0 0.0
        %2116 = vmatpush1.msra.mxu0 %v2069
        %2117 = vmatprep.subr.mxu0 0.0
        %2118 = vmatpush2.msra.mxu0 0.0
        %2119 = vmatprep.subr.mxu0 0.0
        %2120 = vmatpush2.msra.mxu0 0.0
        %2121 = vmatprep.subr.mxu0 0.0
        %2122 = vmatpush2.msra.mxu0 0.0
        %2123 = vmatprep.subr.mxu0 0.0
        %2124 = vmatpush2.msra.mxu0 0.0
        %2125 = vmatprep.subr.mxu0 0.0
        %2126 = vmatpush2.msra.mxu0 0.0
        %2127 = vmatprep.subr.mxu0 0.0
        %2128 = vmatpush2.msra.mxu0 0.0
        %2129 = vmatprep.subr.mxu0 0.0
        %2130 = vmatpush2.msra.mxu0 0.0
        %2131 = vmatprep.subr.mxu0 0.0
        %2132 = vmatpush2.msra.mxu0 0.0
        %2133 = vmatprep.subr.mxu0 0.0
        %2134 = vmatpush2.msra.mxu0 0.0
        %2135 = vmatprep.subr.mxu0 0.0
        %2136 = vmatpush2.msra.mxu0 0.0
        %2137 = vmatprep.subr.mxu0 0.0
        %2138 = vmatpush2.msra.mxu0 0.0
        %2139 = vmatprep.subr.mxu0 0.0
        %2140 = vmatpush2.msra.mxu0 0.0
        %2141 = vmatprep.subr.mxu0 0.0
        %2142 = vmatpush2.msra.mxu0 0.0
        %2143 = vmatprep.subr.mxu0 0.0
        %2144 = vmatpush2.msra.mxu0 0.0
        %2145 = vmatprep.subr.mxu0 0.0
        %2146 = vmatpush2.msra.mxu0 0.0
        %2147 = vmatprep.subr.mxu0 0.0
        %2148 = vmatpush2.msra.mxu0 0.0
        %2149 = vmatprep.mubr.f32.mxu0 0.0
        %2150 = vmatmul.mubr.f32.gmra.mxu0 %v2036
        %v2151 = vpop.f32.mrf.mxu0
        %v2152 = vadd.f32 0.0, %v2151
        %v2153 = vpop.f32.mrf.mxu0
        %2154 = vmatprep.mubr.f32.mxu0 0.0
        %2155 = vmatmul.mubr.f32.gmra.mxu0 %v2037
        %v2156 = vpop.f32.mrf.mxu0
        %v2157 = vadd.f32 0.0, %v2156
        %v2158 = vpop.f32.mrf.mxu0
        %2159 = vmatprep.mubr.f32.mxu0 0.0
        %2160 = vmatmul.mubr.f32.gmra.mxu0 %v2038
        %v2161 = vpop.f32.mrf.mxu0
        %v2162 = vadd.f32 0.0, %v2161
        %v2163 = vpop.f32.mrf.mxu0
        %2164 = vmatprep.mubr.f32.mxu0 0.0
        %2165 = vmatmul.mubr.f32.gmra.mxu0 %v2039
        %v2166 = vpop.f32.mrf.mxu0
        %v2167 = vadd.f32 0.0, %v2166
        %v2168 = vpop.f32.mrf.mxu0
        %2169 = vmatprep.mubr.f32.mxu0 0.0
        %2170 = vmatmul.mubr.f32.gmra.mxu0 %v2040
        %v2171 = vpop.f32.mrf.mxu0
        %v2172 = vadd.f32 0.0, %v2171
        %v2173 = vpop.f32.mrf.mxu0
        %2174 = vmatprep.mubr.f32.mxu0 0.0
        %2175 = vmatmul.mubr.f32.gmra.mxu0 %v2041
        %v2176 = vpop.f32.mrf.mxu0
        %v2177 = vadd.f32 0.0, %v2176
        %v2178 = vpop.f32.mrf.mxu0
        %2179 = vmatprep.mubr.f32.mxu0 0.0
        %2180 = vmatmul.mubr.f32.gmra.mxu0 %v2042
        %v2181 = vpop.f32.mrf.mxu0
        %v2182 = vadd.f32 0.0, %v2181
        %v2183 = vpop.f32.mrf.mxu0
        %2184 = vmatprep.mubr.f32.mxu0 0.0
        %2185 = vmatmul.mubr.f32.gmra.mxu0 %v2043
        %v2186 = vpop.f32.mrf.mxu0
        %v2187 = vadd.f32 0.0, %v2186
        %v2188 = vpop.f32.mrf.mxu0
        %2189 = vmatprep.mubr.f32.mxu0 0.0
        %2190 = vmatmul.mubr.f32.gmra.mxu0 %v2044
        %v2191 = vpop.f32.mrf.mxu0
        %v2192 = vadd.f32 0.0, %v2191
        %v2193 = vpop.f32.mrf.mxu0
        %2194 = vmatprep.mubr.f32.mxu0 0.0
        %2195 = vmatmul.mubr.f32.gmra.mxu0 %v2045
        %v2196 = vpop.f32.mrf.mxu0
        %v2197 = vadd.f32 0.0, %v2196
        %v2198 = vpop.f32.mrf.mxu0
        %2199 = vmatprep.mubr.f32.mxu0 0.0
        %2200 = vmatmul.mubr.f32.gmra.mxu0 %v2046
        %v2201 = vpop.f32.mrf.mxu0
        %v2202 = vadd.f32 0.0, %v2201
        %v2203 = vpop.f32.mrf.mxu0
        %2204 = vmatprep.mubr.f32.mxu0 0.0
        %2205 = vmatmul.mubr.f32.gmra.mxu0 %v2047
        %v2206 = vpop.f32.mrf.mxu0
        %v2207 = vadd.f32 0.0, %v2206
        %v2208 = vpop.f32.mrf.mxu0
        %2209 = vmatprep.mubr.f32.mxu0 0.0
        %2210 = vmatmul.mubr.f32.gmra.mxu0 %v2048
        %v2211 = vpop.f32.mrf.mxu0
        %v2212 = vadd.f32 0.0, %v2211
        %v2213 = vpop.f32.mrf.mxu0
        %2214 = vmatprep.mubr.f32.mxu0 0.0
        %2215 = vmatmul.mubr.f32.gmra.mxu0 %v2049
        %v2216 = vpop.f32.mrf.mxu0
        %v2217 = vadd.f32 0.0, %v2216
        %v2218 = vpop.f32.mrf.mxu0
        %2219 = vmatprep.mubr.f32.mxu0 0.0
        %2220 = vmatmul.mubr.f32.gmra.mxu0 %v2050
        %v2221 = vpop.f32.mrf.mxu0
        %v2222 = vadd.f32 0.0, %v2221
        %v2223 = vpop.f32.mrf.mxu0
        %2224 = vmatprep.mubr.f32.mxu0 0.0
        %2225 = vmatmul.mubr.f32.gmra.mxu0 %v2051
        %v2226 = vpop.f32.mrf.mxu0
        %v2227 = vadd.f32 0.0, %v2226
        %v2228 = vpop.f32.mrf.mxu0
        %2229 = vdwg.mxu0
        %v2230 = vadd.f32 %v2052, %v2152
        %v2231 = vadd.f32 %v2053, %v2157
        %v2232 = vadd.f32 %v2054, %v2162
        %v2233 = vadd.f32 %v2055, %v2167
        %v2234 = vadd.f32 %v2056, %v2172
        %v2235 = vadd.f32 %v2057, %v2177
        %v2236 = vadd.f32 %v2058, %v2182
        %v2237 = vadd.f32 %v2059, %v2187
        %v2238 = vadd.f32 %v2060, %v2192
        %v2239 = vadd.f32 %v2061, %v2197
        %v2240 = vadd.f32 %v2062, %v2202
        %v2241 = vadd.f32 %v2063, %v2207
        %v2242 = vadd.f32 %v2064, %v2212
        %v2243 = vadd.f32 %v2065, %v2217
        %v2244 = vadd.f32 %v2066, %v2222
        %v2245 = vadd.f32 %v2067, %v2227
        %2246 = vst [vmem:[#allocation2] sm:$0xff] %v2230
        %2247 = vst [vmem:[#allocation2 + $0x8] sm:$0xff] %v2231
        %2248 = vst [vmem:[#allocation2 + $0x10] sm:$0xff] %v2232
        %2249 = vst [vmem:[#allocation2 + $0x18] sm:$0xff] %v2233
        %2250 = vst [vmem:[#allocation2 + $0x20] sm:$0xff] %v2234
        %2251 = vst [vmem:[#allocation2 + $0x28] sm:$0xff] %v2235
        %2252 = vst [vmem:[#allocation2 + $0x30] sm:$0xff] %v2236
        %2253 = vst [vmem:[#allocation2 + $0x38] sm:$0xff] %v2237
        %2254 = vst [vmem:[#allocation2 + $0x40] sm:$0xff] %v2238
        %2255 = vst [vmem:[#allocation2 + $0x48] sm:$0xff] %v2239
        %2256 = vst [vmem:[#allocation2 + $0x50] sm:$0xff] %v2240
        %2257 = vst [vmem:[#allocation2 + $0x58] sm:$0xff] %v2241
        %2258 = vst [vmem:[#allocation2 + $0x60] sm:$0xff] %v2242
        %2259 = vst [vmem:[#allocation2 + $0x68] sm:$0xff] %v2243
        %2260 = vst [vmem:[#allocation2 + $0x70] sm:$0xff] %v2244
        %2261 = vst [vmem:[#allocation2 + $0x78] sm:$0xff] %v2245
        %v2262 = vld [vmem:[#allocation2] sm:$0xff]
        %v2263 = vld [vmem:[#allocation2 + $0x8] sm:$0xff]
        %v2264 = vld [vmem:[#allocation2 + $0x10] sm:$0xff]
        %v2265 = vld [vmem:[#allocation2 + $0x18] sm:$0xff]
        %v2266 = vld [vmem:[#allocation2 + $0x20] sm:$0xff]
        %v2267 = vld [vmem:[#allocation2 + $0x28] sm:$0xff]
        %v2268 = vld [vmem:[#allocation2 + $0x30] sm:$0xff]
        %v2269 = vld [vmem:[#allocation2 + $0x38] sm:$0xff]
        %v2270 = vld [vmem:[#allocation2 + $0x40] sm:$0xff]
        %v2271 = vld [vmem:[#allocation2 + $0x48] sm:$0xff]
        %v2272 = vld [vmem:[#allocation2 + $0x50] sm:$0xff]
        %v2273 = vld [vmem:[#allocation2 + $0x58] sm:$0xff]
        %v2274 = vld [vmem:[#allocation2 + $0x60] sm:$0xff]
        %v2275 = vld [vmem:[#allocation2 + $0x68] sm:$0xff]
        %v2276 = vld [vmem:[#allocation2 + $0x70] sm:$0xff]
        %v2277 = vld [vmem:[#allocation2 + $0x78] sm:$0xff]
        %2278 = vst [vmem:[%s193] sm:$0xff] %v2262
        %2279 = vst [vmem:[%s193 + $0x8] sm:$0xff] %v2263
        %2280 = vst [vmem:[%s193 + $0x10] sm:$0xff] %v2264
        %2281 = vst [vmem:[%s193 + $0x18] sm:$0xff] %v2265
        %2282 = vst [vmem:[%s193 + $0x20] sm:$0xff] %v2266
        %2283 = vst [vmem:[%s193 + $0x28] sm:$0xff] %v2267
        %2284 = vst [vmem:[%s193 + $0x30] sm:$0xff] %v2268
        %2285 = vst [vmem:[%s193 + $0x38] sm:$0xff] %v2269
        %2286 = vst [vmem:[%s193 + $0x40] sm:$0xff] %v2270
        %2287 = vst [vmem:[%s193 + $0x48] sm:$0xff] %v2271
        %2288 = vst [vmem:[%s193 + $0x50] sm:$0xff] %v2272
        %2289 = vst [vmem:[%s193 + $0x58] sm:$0xff] %v2273
        %2290 = vst [vmem:[%s193 + $0x60] sm:$0xff] %v2274
        %2291 = vst [vmem:[%s193 + $0x68] sm:$0xff] %v2275
        %2292 = vst [vmem:[%s193 + $0x70] sm:$0xff] %v2276
        %2293 = vst [vmem:[%s193 + $0x78] sm:$0xff] %v2277
        %v2294 = vadd.f32 %v2262, %v2263
        %v2295 = vadd.f32 %v2294, %v2264
        %v2296 = vadd.f32 %v2295, %v2265
        %v2297 = vadd.f32 %v2296, %v2266
        %v2298 = vadd.f32 %v2297, %v2267
        %v2299 = vadd.f32 %v2298, %v2268
        %v2300 = vadd.f32 %v2299, %v2269
        %v2301 = vadd.f32 %v2300, %v2270
        %v2302 = vadd.f32 %v2301, %v2271
        %v2303 = vadd.f32 %v2302, %v2272
        %v2304 = vadd.f32 %v2303, %v2273
        %v2305 = vadd.f32 %v2304, %v2274
        %v2306 = vadd.f32 %v2305, %v2275
        %v2307 = vadd.f32 %v2306, %v2276
        %v2308 = vadd.f32 %v2307, %v2277
        %v2309 = vrot.slane %v2308, 4
        %v2310 = vadd.f32 %v2308, %v2309
        %v2311 = vrot.slane %v2310, 2
        %v2312 = vadd.f32 %v2310, %v2311
        %v2313 = vrot.slane %v2312, 1
        %v2314 = vadd.f32 %v2312, %v2313
        %2315 = vst [vmem:[%s200] sm:$0x1] %v2314
        %v2316 = vmul.f32 %v2262, %v2262
        %v2317 = vmul.f32 %v2263, %v2263
        %v2318 = vmul.f32 %v2264, %v2264
        %v2319 = vmul.f32 %v2265, %v2265
        %v2320 = vmul.f32 %v2266, %v2266
        %v2321 = vmul.f32 %v2267, %v2267
        %v2322 = vmul.f32 %v2268, %v2268
        %v2323 = vmul.f32 %v2269, %v2269
        %v2324 = vmul.f32 %v2270, %v2270
        %v2325 = vmul.f32 %v2271, %v2271
        %v2326 = vmul.f32 %v2272, %v2272
        %v2327 = vmul.f32 %v2273, %v2273
        %v2328 = vmul.f32 %v2274, %v2274
        %v2329 = vmul.f32 %v2275, %v2275
        %v2330 = vmul.f32 %v2276, %v2276
        %v2331 = vmul.f32 %v2277, %v2277
        %v2332 = vadd.f32 %v2316, %v2317
        %v2333 = vadd.f32 %v2332, %v2318
        %v2334 = vadd.f32 %v2333, %v2319
        %v2335 = vadd.f32 %v2334, %v2320
        %v2336 = vadd.f32 %v2335, %v2321
        %v2337 = vadd.f32 %v2336, %v2322
        %v2338 = vadd.f32 %v2337, %v2323
        %v2339 = vadd.f32 %v2338, %v2324
        %v2340 = vadd.f32 %v2339, %v2325
        %v2341 = vadd.f32 %v2340, %v2326
        %v2342 = vadd.f32 %v2341, %v2327
        %v2343 = vadd.f32 %v2342, %v2328
        %v2344 = vadd.f32 %v2343, %v2329
        %v2345 = vadd.f32 %v2344, %v2330
        %v2346 = vadd.f32 %v2345, %v2331
        %v2347 = vrot.slane %v2346, 4
        %v2348 = vadd.f32 %v2346, %v2347
        %v2349 = vrot.slane %v2348, 2
        %v2350 = vadd.f32 %v2348, %v2349
        %v2351 = vrot.slane %v2350, 1
        %v2352 = vadd.f32 %v2350, %v2351
        %2353 = vst [vmem:[%s200 + $0x1] sm:$0x1] %v2352
        %s2354 = sand.u32 %s92, 1
        %s2355 = scalar_lea.sflag [#allocation4], %s2354
        %s2356 = sand.u32 %s92, 1
        %s2357 = smul.addr %s2356, 128
        %s2358 = scalar_lea.vmem [#allocation3], %s2357
        %s2359 = sand.u32 %s120, 1
        %s2360 = scalar_lea.sflag [#allocation6], %s2359
        %s2361 = sand.u32 %s120, 1
        %s2362 = smul.addr %s2361, 2
        %s2363 = scalar_lea.vmem [#allocation5], %s2362
        // Predicated region
        $region29: #{tpu_custom_call.1} parent=27 // pred_check
          %p2364 = pneg %p102
        $region30: #{tpu_custom_call.1} parent=27 // pred_check_branch
          %2366 = sbr.rel (%p2364) target = $region32
        $region31: #{tpu_custom_call.1} parent=27 // pred_region
          %s2367 = smul.u32 8, %s26
          %s2369 = ssub.s32 2048, 2048
          %2370 = vsyncadd %s2355, %s2369
          %s2371 = smul.addr %s2367, 2
          %s2372 = smul.addr %s25, 32
          %s2373 = sadd.s32 %s2371, %s2372
          %s2374 = smul.addr %s2373, 128
          %s2375 = scalar_lea.hbm %s2, %s2374
          %s2376 = sshll.u32 %s2358, 4
          %s2377 = int_to_ptr.vmem [resolvable:$true] %s2376
          %2382 = dma.vmem_to_hbm [thread:$0]  %s2377, 2048, %s2375, %s2355, 128, 128, 8
        $region32: #{tpu_custom_call.1} parent=27 // pred_fallthru
          _
        // Predicated region
        $region33: #{tpu_custom_call.1} parent=27 // pred_check
          %p2383 = pneg %p130
        $region34: #{tpu_custom_call.1} parent=27 // pred_check_branch
          %2385 = sbr.rel (%p2383) target = $region36
        $region35: #{tpu_custom_call.1} parent=27 // pred_region
          %s2387 = ssub.s32 32, 32
          %2388 = vsyncadd %s2360, %s2387
          %s2389 = smul.addr %s25, 2
          %s2390 = sadd.s32 %s26, %s2389
          %s2391 = smul.addr %s2390, 32
          %s2392 = scalar_lea.hbm %s3, %s2391
          %s2394 = sshll.u32 %s2363, 4
          %s2395 = int_to_ptr.vmem [resolvable:$true] %s2394
          %2397 = dma.vmem_to_hbm [thread:$0]  %s2395, 32, %s2392, %s2360
        $region36: #{tpu_custom_call.1} parent=27 // pred_fallthru
          _
      $region28: #{tpu_custom_call.1} parent=5 // pred_fallthru
        _
      %p2398 = scmp.le.s32.totalorder 2, %s16
      // Predicated region
      $region37: #{tpu_custom_call.1} parent=5 // pred_check
        %p2399 = pneg %p2398
      $region38: #{tpu_custom_call.1} parent=5 // pred_check_branch
        %2401 = sbr.rel (%p2399) target = $region40
      $region39: #{tpu_custom_call.1} parent=5 // pred_region
        %s2402 = ssub.s32 %s16, 2
        // Predicated region
        $region41: #{tpu_custom_call.1} parent=39 // pred_check
          %p2403 = pneg %p108
        $region42: #{tpu_custom_call.1} parent=39 // pred_check_branch
          %2405 = sbr.rel (%p2403) target = $region44
        $region43: #{tpu_custom_call.1} parent=39 // pred_region
          %s2406 = sand.u32 %s93, 1
          %s2407 = scalar_lea.sflag [#allocation4], %s2406
          %s2408 = sand.u32 %s93, 1
          %s2409 = smul.addr %s2408, 128
          %s2410 = scalar_lea.vmem [#allocation3], %s2409
          %2411 = dma.done %s2407, 2048
        $region44: #{tpu_custom_call.1} parent=39 // pred_fallthru
          _
        // Predicated region
        $region45: #{tpu_custom_call.1} parent=39 // pred_check
          %p2412 = pneg %p136
        $region46: #{tpu_custom_call.1} parent=39 // pred_check_branch
          %2414 = sbr.rel (%p2412) target = $region48
        $region47: #{tpu_custom_call.1} parent=39 // pred_region
          %s2415 = sand.u32 %s121, 1
          %s2416 = scalar_lea.sflag [#allocation6], %s2415
          %s2417 = sand.u32 %s121, 1
          %s2418 = smul.addr %s2417, 2
          %s2419 = scalar_lea.vmem [#allocation5], %s2418
          %2420 = dma.done %s2416, 32
        $region48: #{tpu_custom_call.1} parent=39 // pred_fallthru
          _
      $region40: #{tpu_custom_call.1} parent=5 // pred_fallthru
        _
    $region6: #{tpu_custom_call.1} parent=1 // loop_footer
      %s20 = sadd.s32 1, %s16
    $region7: #{tpu_custom_call.1} parent=1 // loop_footer_branch
      %15 = sbr.rel target = $region3
    $region8: #{tpu_custom_call.1} parent=1 // loop_exit
      _
    %2421 = vsyncpa [#allocation4], 1
    %s2422 = scalar_lea.sflag [#allocation4], 1
    %2423 = vsyncpa %s2422, 1
    %2424 = vsyncpa [#allocation6], 1
    %s2425 = scalar_lea.sflag [#allocation6], 1
    %2426 = vsyncpa %s2425, 1

</llo_original>
